<compile_context>
chip_gen: v7x
topology: tpu7x:2x2x1
jax: 0.10.0
libtpu: 0.0.40
codegen_flags: <defaults>
</compile_context>

<pallas_src>
import math

import jax
import jax.numpy as jnp
from jax.experimental import pallas as pl
from jax.experimental.pallas import tpu as pltpu


# ----------------------------- config -------------------------------------
N_EMBD = 32
N_HEAD = 4
HEAD_DIM = N_EMBD // N_HEAD
MLP_RATIO = 4
MLP_HIDDEN = MLP_RATIO * N_EMBD          # = 128, lane-dense hidden dim
LN_EPS = 1e-5


def _layer_norm(x, gamma):
    # F.layer_norm over last dim, eps=1e-5, no bias (config.bias=False). f32.
    mu = jnp.mean(x, axis=-1, keepdims=True)
    var = jnp.mean((x - mu) ** 2, axis=-1, keepdims=True)
    return (x - mu) * jax.lax.rsqrt(var + LN_EPS) * gamma


def _make_block_kernel(B, T):
    C = N_EMBD
    BT = B * T

    def kernel(x_ref, ln1_ref, a_ref, vp_ref, bias_ref,
               ln2_ref, wfc_ref, wmlp_ref, o_ref):
        """Single invocation: whole (B*T, C) slab + all weights resident in VMEM."""
        x = x_ref[...]                                  # (BT, C) f32
        bias = bias_ref[...]                            # (BT, BT) f32 additive mask

        # ---------------- attention branch ----------------
        xn = _layer_norm(x, ln1_ref[...])               # f32
        xn_b = xn.astype(jnp.bfloat16)                  # MXU operand dtype

        y = jnp.zeros((BT, C), jnp.float32)
        for h in range(N_HEAD):                         # static 4-iter loop
            # s_h = (xn @ A_h) . xn  with A_h = Wq_h Wk_h^T / sqrt(hd) (folded)
            t = jnp.dot(xn_b, a_ref[h],
                        preferred_element_type=jnp.float32)          # (BT, C)
            s = jax.lax.dot_general(                     # contraction on last dims:
                t.astype(jnp.bfloat16), xn_b,            # no k^T transpose
                dimension_numbers=(((1,), (1,)), ((), ())),
                preferred_element_type=jnp.float32)                  # (BT, BT)
            s = s + bias                                 # block-diag causal mask
            s = s - jnp.max(s, axis=-1, keepdims=True)
            p = jnp.exp(s)
            p = p * pl.reciprocal(jnp.sum(p, axis=-1, keepdims=True),
                                  approx=True)           # EUP reciprocal
            # y_h = p_h @ (xn @ (Wv_h Wproj_h))  -- folded (C,C), no hd-wide slices
            u = jnp.dot(xn_b, vp_ref[h],
                        preferred_element_type=jnp.float32)          # (BT, C)
            y = y + jnp.dot(p.astype(jnp.bfloat16), u.astype(jnp.bfloat16),
                            preferred_element_type=jnp.float32)
        x = x + y                                        # residual 1 (f32)

        # ---------------- MLP branch ----------------
        xn2 = _layer_norm(x, ln2_ref[...])               # f32
        h1 = jnp.dot(xn2.astype(jnp.bfloat16), wfc_ref[...],
                     preferred_element_type=jnp.float32)  # (BT, 128) lane-dense
        h1 = jax.nn.gelu(h1, approximate=True)            # tanh GELU -> EUP
        h2 = jnp.dot(h1.astype(jnp.bfloat16), wmlp_ref[...],
                     preferred_element_type=jnp.float32)
        o_ref[...] = x + h2                                # residual 2 (f32)

    return kernel


# ----------------------------- host-side prep ------------------------------
def prepare_block_params(params, B, T):
    """One-time host-side parameter transform (not on the hot path):
       fold per-head Wq.Wk^T/sqrt(hd) and Wv.Wproj into (H,C,C) matrices,
       build the additive block-diagonal causal mask bias, and cast all
       matmul weights to bf16 (f32 accumulation happens in-kernel)."""
    C, hd = N_EMBD, HEAD_DIM
    wq, wk, wv = jnp.split(params["w_attn"], 3, axis=1)     # each (C, C)
    wproj = params["w_proj"]                                 # (C, C)

    a_heads, vp_heads = [], []
    for h in range(N_HEAD):
        c0 = h * hd
        a_heads.append((wq[:, c0:c0 + hd] @ wk[:, c0:c0 + hd].T) / math.sqrt(hd))
        vp_heads.append(wv[:, c0:c0 + hd] @ wproj[c0:c0 + hd, :])
    a_heads = jnp.stack(a_heads).astype(jnp.bfloat16)        # (H, C, C)
    vp_heads = jnp.stack(vp_heads).astype(jnp.bfloat16)      # (H, C, C)

    BT = B * T
    ri = jax.lax.broadcasted_iota(jnp.int32, (BT, BT), 0)
    ci = jax.lax.broadcasted_iota(jnp.int32, (BT, BT), 1)
    ok = (ci <= ri) & ((ci // T) == (ri // T))               # causal & same batch
    mask_bias = jnp.where(ok, 0.0, -1e30).astype(jnp.float32)

    return {
        "ln1_w": params["ln1_w"].astype(jnp.float32),        # (1, C)
        "ln2_w": params["ln2_w"].astype(jnp.float32),        # (1, C)
        "a_heads": a_heads,
        "vp_heads": vp_heads,
        "mask_bias": mask_bias,                              # (BT, BT)
        "w_fc": params["w_fc"].astype(jnp.bfloat16),         # (C, 4C)
        "w_mlp_proj": params["w_mlp_proj"].astype(jnp.bfloat16),  # (4C, C)
    }


def block_forward(x, folded):
    """x: (B, T, C) float32; folded: output of prepare_block_params."""
    B, T, C = x.shape
    x2d = x.reshape(B * T, C)                 # free reshape outside the kernel
    vmem = pl.BlockSpec(memory_space=pltpu.MemorySpace.VMEM)
    out2d = pl.pallas_call(
        _make_block_kernel(B, T),
        out_shape=jax.ShapeDtypeStruct((B * T, C), jnp.float32),
        in_specs=[vmem] * 8,                  # whole arrays in VMEM, no grid
        out_specs=vmem,
    )(x2d, folded["ln1_w"], folded["a_heads"], folded["vp_heads"],
      folded["mask_bias"], folded["ln2_w"], folded["w_fc"],
      folded["w_mlp_proj"])
    return out2d.reshape(B, T, C)


# ----------------------------- reference (pure JAX, f32, exact) ------------
def block_reference(x, params):
    def ln(v, g):
        mu = jnp.mean(v, axis=-1, keepdims=True)
        var = jnp.mean((v - mu) ** 2, axis=-1, keepdims=True)
        return (v - mu) / jnp.sqrt(var + LN_EPS) * g

    B, T, C = x.shape
    xn = ln(x, params["ln1_w"][0])
    qkv = xn @ params["w_attn"]
    q, k, v = jnp.split(qkv, 3, axis=-1)
    q = q.reshape(B, T, N_HEAD, HEAD_DIM).transpose(0, 2, 1, 3)
    k = k.reshape(B, T, N_HEAD, HEAD_DIM).transpose(0, 2, 1, 3)
    v = v.reshape(B, T, N_HEAD, HEAD_DIM).transpose(0, 2, 1, 3)
    s = jnp.einsum("bhtd,bhsd->bhts", q, k) / math.sqrt(HEAD_DIM)
    mask = jnp.tril(jnp.ones((T, T), bool))
    s = jnp.where(mask, s, -jnp.inf)
    p = jax.nn.softmax(s, axis=-1)
    y = jnp.einsum("bhts,bhsd->bhtd", p, v)
    y = y.transpose(0, 2, 1, 3).reshape(B, T, C)
    x = x + y @ params["w_proj"]
    xn2 = ln(x, params["ln2_w"][0])
    h = jax.nn.gelu(xn2 @ params["w_fc"], approximate=False)
    return x + h @ params["w_mlp_proj"]


# ----------------------------- main ----------------------------------------
if __name__ == "__main__":
    key = jax.random.PRNGKey(0)
    kx, k1, k2, k3, k4 = jax.random.split(key, 5)

    B, T, C = 2, 8, N_EMBD
    x = jax.random.normal(kx, (B, T, C), jnp.float32)

    # Deterministic parameter init (Linear weights stored pre-transposed so
    # that y = x @ W; bias=False throughout, LayerNorm weight = ones).
    params = {
        "ln1_w": jnp.ones((1, C), jnp.float32),
        "ln2_w": jnp.ones((1, C), jnp.float32),
        "w_attn": jax.random.normal(k1, (C, 3 * C), jnp.float32) * 0.02,
        "w_proj": jax.random.normal(k2, (C, C), jnp.float32) * 0.02,
        "w_fc": jax.random.normal(k3, (C, MLP_HIDDEN), jnp.float32) * 0.02,
        "w_mlp_proj": jax.random.normal(k4, (MLP_HIDDEN, C), jnp.float32) * 0.02,
    }

    folded = prepare_block_params(params, B, T)
    out = jax.block_until_ready(block_forward(x, folded))
    ref = block_reference(x, params)

    assert out.shape == (B, T, C)
    # bf16 MXU operands + approx GELU / reciprocal: gate relaxed from 1e-4.
    max_err = float(jnp.max(jnp.abs(out - ref)))
    assert jnp.allclose(out, ref, atol=1e-2, rtol=1e-2), (
        f"max abs err = {max_err}")
    print("KERNEL_OK")
</pallas_src>

<mosaic_0001>
module attributes {stable_mosaic.version = 11 : i64} {
  func.func @kernel(%arg0: memref<16x32xf32, #tpu.memory_space<vmem>>, %arg1: memref<1x32xf32, #tpu.memory_space<vmem>>, %arg2: memref<4x32x32xbf16, #tpu.memory_space<vmem>>, %arg3: memref<4x32x32xbf16, #tpu.memory_space<vmem>>, %arg4: memref<16x16xf32, #tpu.memory_space<vmem>>, %arg5: memref<1x32xf32, #tpu.memory_space<vmem>>, %arg6: memref<32x128xbf16, #tpu.memory_space<vmem>>, %arg7: memref<128x32xbf16, #tpu.memory_space<vmem>>, %arg8: memref<16x32xf32, #tpu.memory_space<vmem>>) attributes {dimension_semantics = [], scalar_prefetch = 0 : i64, scratch_operands = 0 : i64, tpu.core_type = #tpu.core_type<tc>} {
    %c0 = arith.constant 0 : index
    %c0_0 = arith.constant 0 : index
    %0 = vector.load %arg0[%c0, %c0_0] : memref<16x32xf32, #tpu.memory_space<vmem>>, vector<16x32xf32>
    %c0_1 = arith.constant 0 : index
    %c0_2 = arith.constant 0 : index
    %1 = vector.load %arg4[%c0_1, %c0_2] : memref<16x16xf32, #tpu.memory_space<vmem>>, vector<16x16xf32>
    %c0_3 = arith.constant 0 : index
    %c0_4 = arith.constant 0 : index
    %2 = vector.load %arg1[%c0_3, %c0_4] : memref<1x32xf32, #tpu.memory_space<vmem>>, vector<1x32xf32>
    %cst = arith.constant dense<0.000000e+00> : vector<16xf32>
    %3 = vector.multi_reduction <add>, %0, %cst [1] : vector<16x32xf32> to vector<16xf32>
    %4 = vector.shape_cast %3 : vector<16xf32> to vector<16x1xf32>
    %cst_5 = arith.constant 3.200000e+01 : f32
    %5 = vector.broadcast %cst_5 : f32 to vector<16x1xf32>
    %6 = arith.divf %4, %5 : vector<16x1xf32>
    %7 = vector.broadcast %6 : vector<16x1xf32> to vector<16x32xf32>
    %8 = arith.subf %0, %7 : vector<16x32xf32>
    %9 = arith.mulf %8, %8 : vector<16x32xf32>
    %cst_6 = arith.constant dense<0.000000e+00> : vector<16xf32>
    %10 = vector.multi_reduction <add>, %9, %cst_6 [1] : vector<16x32xf32> to vector<16xf32>
    %11 = vector.shape_cast %10 : vector<16xf32> to vector<16x1xf32>
    %cst_7 = arith.constant 3.200000e+01 : f32
    %12 = vector.broadcast %cst_7 : f32 to vector<16x1xf32>
    %13 = arith.divf %11, %12 : vector<16x1xf32>
    %14 = vector.broadcast %6 : vector<16x1xf32> to vector<16x32xf32>
    %15 = arith.subf %0, %14 : vector<16x32xf32>
    %cst_8 = arith.constant 9.99999974E-6 : f32
    %16 = vector.broadcast %cst_8 : f32 to vector<16x1xf32>
    %17 = arith.addf %13, %16 : vector<16x1xf32>
    %18 = math.rsqrt %17 : vector<16x1xf32>
    %19 = vector.broadcast %18 : vector<16x1xf32> to vector<16x32xf32>
    %20 = arith.mulf %15, %19 : vector<16x32xf32>
    %21 = vector.broadcast %2 : vector<1x32xf32> to vector<16x32xf32>
    %22 = arith.mulf %20, %21 : vector<16x32xf32>
    %23 = arith.truncf %22 : vector<16x32xf32> to vector<16x32xbf16>
    %cst_9 = arith.constant 0.000000e+00 : f32
    %24 = vector.broadcast %cst_9 : f32 to vector<16x32xf32>
    %c0_10 = arith.constant 0 : index
    %c0_11 = arith.constant 0 : index
    %c0_12 = arith.constant 0 : index
    %25 = vector.load %arg2[%c0_10, %c0_11, %c0_12] : memref<4x32x32xbf16, #tpu.memory_space<vmem>>, vector<1x32x32xbf16>
    %26 = vector.shape_cast %25 : vector<1x32x32xbf16> to vector<32x32xbf16>
    %cst_13 = arith.constant dense<0.000000e+00> : vector<16x32xf32>
    %27 = tpu.matmul %23, %26, %cst_13 {dimension_numbers = #tpu.dot_dimension_numbers<[1], [0], [0], [1], [0, 0, 1, 1], [], []>} : vector<16x32xbf16>, vector<32x32xbf16>, vector<16x32xf32> -> vector<16x32xf32>
    %28 = arith.truncf %27 : vector<16x32xf32> to vector<16x32xbf16>
    %cst_14 = arith.constant dense<0.000000e+00> : vector<16x16xf32>
    %29 = tpu.matmul %28, %23, %cst_14 {dimension_numbers = #tpu.dot_dimension_numbers<[1], [1], [0], [0], [0, 0, 1, 0], [], []>} : vector<16x32xbf16>, vector<16x32xbf16>, vector<16x16xf32> -> vector<16x16xf32>
    %30 = arith.addf %29, %1 : vector<16x16xf32>
    %cst_15 = arith.constant dense<0xFF800000> : vector<16xf32>
    %31 = vector.multi_reduction <maximumf>, %30, %cst_15 [1] : vector<16x16xf32> to vector<16xf32>
    %32 = vector.shape_cast %31 : vector<16xf32> to vector<16x1xf32>
    %33 = vector.broadcast %32 : vector<16x1xf32> to vector<16x16xf32>
    %34 = arith.subf %30, %33 : vector<16x16xf32>
    %35 = math.exp %34 : vector<16x16xf32>
    %cst_16 = arith.constant dense<0.000000e+00> : vector<16xf32>
    %36 = vector.multi_reduction <add>, %35, %cst_16 [1] : vector<16x16xf32> to vector<16xf32>
    %37 = vector.shape_cast %36 : vector<16xf32> to vector<16x1xf32>
    %38 = tpu.reciprocal %37 {approx = true} : vector<16x1xf32> -> vector<16x1xf32>
    %39 = vector.broadcast %38 : vector<16x1xf32> to vector<16x16xf32>
    %40 = arith.mulf %35, %39 : vector<16x16xf32>
    %c0_17 = arith.constant 0 : index
    %c0_18 = arith.constant 0 : index
    %c0_19 = arith.constant 0 : index
    %41 = vector.load %arg3[%c0_17, %c0_18, %c0_19] : memref<4x32x32xbf16, #tpu.memory_space<vmem>>, vector<1x32x32xbf16>
    %42 = vector.shape_cast %41 : vector<1x32x32xbf16> to vector<32x32xbf16>
    %cst_20 = arith.constant dense<0.000000e+00> : vector<16x32xf32>
    %43 = tpu.matmul %23, %42, %cst_20 {dimension_numbers = #tpu.dot_dimension_numbers<[1], [0], [0], [1], [0, 0, 1, 1], [], []>} : vector<16x32xbf16>, vector<32x32xbf16>, vector<16x32xf32> -> vector<16x32xf32>
    %44 = arith.truncf %40 : vector<16x16xf32> to vector<16x16xbf16>
    %45 = arith.truncf %43 : vector<16x32xf32> to vector<16x32xbf16>
    %cst_21 = arith.constant dense<0.000000e+00> : vector<16x32xf32>
    %46 = tpu.matmul %44, %45, %cst_21 {dimension_numbers = #tpu.dot_dimension_numbers<[1], [0], [0], [1], [0, 0, 1, 1], [], []>} : vector<16x16xbf16>, vector<16x32xbf16>, vector<16x32xf32> -> vector<16x32xf32>
    %47 = arith.addf %24, %46 : vector<16x32xf32>
    %c1 = arith.constant 1 : index
    %c0_22 = arith.constant 0 : index
    %c0_23 = arith.constant 0 : index
    %48 = vector.load %arg2[%c1, %c0_22, %c0_23] : memref<4x32x32xbf16, #tpu.memory_space<vmem>>, vector<1x32x32xbf16>
    %49 = vector.shape_cast %48 : vector<1x32x32xbf16> to vector<32x32xbf16>
    %cst_24 = arith.constant dense<0.000000e+00> : vector<16x32xf32>
    %50 = tpu.matmul %23, %49, %cst_24 {dimension_numbers = #tpu.dot_dimension_numbers<[1], [0], [0], [1], [0, 0, 1, 1], [], []>} : vector<16x32xbf16>, vector<32x32xbf16>, vector<16x32xf32> -> vector<16x32xf32>
    %51 = arith.truncf %50 : vector<16x32xf32> to vector<16x32xbf16>
    %cst_25 = arith.constant dense<0.000000e+00> : vector<16x16xf32>
    %52 = tpu.matmul %51, %23, %cst_25 {dimension_numbers = #tpu.dot_dimension_numbers<[1], [1], [0], [0], [0, 0, 1, 0], [], []>} : vector<16x32xbf16>, vector<16x32xbf16>, vector<16x16xf32> -> vector<16x16xf32>
    %53 = arith.addf %52, %1 : vector<16x16xf32>
    %cst_26 = arith.constant dense<0xFF800000> : vector<16xf32>
    %54 = vector.multi_reduction <maximumf>, %53, %cst_26 [1] : vector<16x16xf32> to vector<16xf32>
    %55 = vector.shape_cast %54 : vector<16xf32> to vector<16x1xf32>
    %56 = vector.broadcast %55 : vector<16x1xf32> to vector<16x16xf32>
    %57 = arith.subf %53, %56 : vector<16x16xf32>
    %58 = math.exp %57 : vector<16x16xf32>
    %cst_27 = arith.constant dense<0.000000e+00> : vector<16xf32>
    %59 = vector.multi_reduction <add>, %58, %cst_27 [1] : vector<16x16xf32> to vector<16xf32>
    %60 = vector.shape_cast %59 : vector<16xf32> to vector<16x1xf32>
    %61 = tpu.reciprocal %60 {approx = true} : vector<16x1xf32> -> vector<16x1xf32>
    %62 = vector.broadcast %61 : vector<16x1xf32> to vector<16x16xf32>
    %63 = arith.mulf %58, %62 : vector<16x16xf32>
    %c1_28 = arith.constant 1 : index
    %c0_29 = arith.constant 0 : index
    %c0_30 = arith.constant 0 : index
    %64 = vector.load %arg3[%c1_28, %c0_29, %c0_30] : memref<4x32x32xbf16, #tpu.memory_space<vmem>>, vector<1x32x32xbf16>
    %65 = vector.shape_cast %64 : vector<1x32x32xbf16> to vector<32x32xbf16>
    %cst_31 = arith.constant dense<0.000000e+00> : vector<16x32xf32>
    %66 = tpu.matmul %23, %65, %cst_31 {dimension_numbers = #tpu.dot_dimension_numbers<[1], [0], [0], [1], [0, 0, 1, 1], [], []>} : vector<16x32xbf16>, vector<32x32xbf16>, vector<16x32xf32> -> vector<16x32xf32>
    %67 = arith.truncf %63 : vector<16x16xf32> to vector<16x16xbf16>
    %68 = arith.truncf %66 : vector<16x32xf32> to vector<16x32xbf16>
    %cst_32 = arith.constant dense<0.000000e+00> : vector<16x32xf32>
    %69 = tpu.matmul %67, %68, %cst_32 {dimension_numbers = #tpu.dot_dimension_numbers<[1], [0], [0], [1], [0, 0, 1, 1], [], []>} : vector<16x16xbf16>, vector<16x32xbf16>, vector<16x32xf32> -> vector<16x32xf32>
    %70 = arith.addf %47, %69 : vector<16x32xf32>
    %c2 = arith.constant 2 : index
    %c0_33 = arith.constant 0 : index
    %c0_34 = arith.constant 0 : index
    %71 = vector.load %arg2[%c2, %c0_33, %c0_34] : memref<4x32x32xbf16, #tpu.memory_space<vmem>>, vector<1x32x32xbf16>
    %72 = vector.shape_cast %71 : vector<1x32x32xbf16> to vector<32x32xbf16>
    %cst_35 = arith.constant dense<0.000000e+00> : vector<16x32xf32>
    %73 = tpu.matmul %23, %72, %cst_35 {dimension_numbers = #tpu.dot_dimension_numbers<[1], [0], [0], [1], [0, 0, 1, 1], [], []>} : vector<16x32xbf16>, vector<32x32xbf16>, vector<16x32xf32> -> vector<16x32xf32>
    %74 = arith.truncf %73 : vector<16x32xf32> to vector<16x32xbf16>
    %cst_36 = arith.constant dense<0.000000e+00> : vector<16x16xf32>
    %75 = tpu.matmul %74, %23, %cst_36 {dimension_numbers = #tpu.dot_dimension_numbers<[1], [1], [0], [0], [0, 0, 1, 0], [], []>} : vector<16x32xbf16>, vector<16x32xbf16>, vector<16x16xf32> -> vector<16x16xf32>
    %76 = arith.addf %75, %1 : vector<16x16xf32>
    %cst_37 = arith.constant dense<0xFF800000> : vector<16xf32>
    %77 = vector.multi_reduction <maximumf>, %76, %cst_37 [1] : vector<16x16xf32> to vector<16xf32>
    %78 = vector.shape_cast %77 : vector<16xf32> to vector<16x1xf32>
    %79 = vector.broadcast %78 : vector<16x1xf32> to vector<16x16xf32>
    %80 = arith.subf %76, %79 : vector<16x16xf32>
    %81 = math.exp %80 : vector<16x16xf32>
    %cst_38 = arith.constant dense<0.000000e+00> : vector<16xf32>
    %82 = vector.multi_reduction <add>, %81, %cst_38 [1] : vector<16x16xf32> to vector<16xf32>
    %83 = vector.shape_cast %82 : vector<16xf32> to vector<16x1xf32>
    %84 = tpu.reciprocal %83 {approx = true} : vector<16x1xf32> -> vector<16x1xf32>
    %85 = vector.broadcast %84 : vector<16x1xf32> to vector<16x16xf32>
    %86 = arith.mulf %81, %85 : vector<16x16xf32>
    %c2_39 = arith.constant 2 : index
    %c0_40 = arith.constant 0 : index
    %c0_41 = arith.constant 0 : index
    %87 = vector.load %arg3[%c2_39, %c0_40, %c0_41] : memref<4x32x32xbf16, #tpu.memory_space<vmem>>, vector<1x32x32xbf16>
    %88 = vector.shape_cast %87 : vector<1x32x32xbf16> to vector<32x32xbf16>
    %cst_42 = arith.constant dense<0.000000e+00> : vector<16x32xf32>
    %89 = tpu.matmul %23, %88, %cst_42 {dimension_numbers = #tpu.dot_dimension_numbers<[1], [0], [0], [1], [0, 0, 1, 1], [], []>} : vector<16x32xbf16>, vector<32x32xbf16>, vector<16x32xf32> -> vector<16x32xf32>
    %90 = arith.truncf %86 : vector<16x16xf32> to vector<16x16xbf16>
    %91 = arith.truncf %89 : vector<16x32xf32> to vector<16x32xbf16>
    %cst_43 = arith.constant dense<0.000000e+00> : vector<16x32xf32>
    %92 = tpu.matmul %90, %91, %cst_43 {dimension_numbers = #tpu.dot_dimension_numbers<[1], [0], [0], [1], [0, 0, 1, 1], [], []>} : vector<16x16xbf16>, vector<16x32xbf16>, vector<16x32xf32> -> vector<16x32xf32>
    %93 = arith.addf %70, %92 : vector<16x32xf32>
    %c3 = arith.constant 3 : index
    %c0_44 = arith.constant 0 : index
    %c0_45 = arith.constant 0 : index
    %94 = vector.load %arg2[%c3, %c0_44, %c0_45] : memref<4x32x32xbf16, #tpu.memory_space<vmem>>, vector<1x32x32xbf16>
    %95 = vector.shape_cast %94 : vector<1x32x32xbf16> to vector<32x32xbf16>
    %cst_46 = arith.constant dense<0.000000e+00> : vector<16x32xf32>
    %96 = tpu.matmul %23, %95, %cst_46 {dimension_numbers = #tpu.dot_dimension_numbers<[1], [0], [0], [1], [0, 0, 1, 1], [], []>} : vector<16x32xbf16>, vector<32x32xbf16>, vector<16x32xf32> -> vector<16x32xf32>
    %97 = arith.truncf %96 : vector<16x32xf32> to vector<16x32xbf16>
    %cst_47 = arith.constant dense<0.000000e+00> : vector<16x16xf32>
    %98 = tpu.matmul %97, %23, %cst_47 {dimension_numbers = #tpu.dot_dimension_numbers<[1], [1], [0], [0], [0, 0, 1, 0], [], []>} : vector<16x32xbf16>, vector<16x32xbf16>, vector<16x16xf32> -> vector<16x16xf32>
    %99 = arith.addf %98, %1 : vector<16x16xf32>
    %cst_48 = arith.constant dense<0xFF800000> : vector<16xf32>
    %100 = vector.multi_reduction <maximumf>, %99, %cst_48 [1] : vector<16x16xf32> to vector<16xf32>
    %101 = vector.shape_cast %100 : vector<16xf32> to vector<16x1xf32>
    %102 = vector.broadcast %101 : vector<16x1xf32> to vector<16x16xf32>
    %103 = arith.subf %99, %102 : vector<16x16xf32>
    %104 = math.exp %103 : vector<16x16xf32>
    %cst_49 = arith.constant dense<0.000000e+00> : vector<16xf32>
    %105 = vector.multi_reduction <add>, %104, %cst_49 [1] : vector<16x16xf32> to vector<16xf32>
    %106 = vector.shape_cast %105 : vector<16xf32> to vector<16x1xf32>
    %107 = tpu.reciprocal %106 {approx = true} : vector<16x1xf32> -> vector<16x1xf32>
    %108 = vector.broadcast %107 : vector<16x1xf32> to vector<16x16xf32>
    %109 = arith.mulf %104, %108 : vector<16x16xf32>
    %c3_50 = arith.constant 3 : index
    %c0_51 = arith.constant 0 : index
    %c0_52 = arith.constant 0 : index
    %110 = vector.load %arg3[%c3_50, %c0_51, %c0_52] : memref<4x32x32xbf16, #tpu.memory_space<vmem>>, vector<1x32x32xbf16>
    %111 = vector.shape_cast %110 : vector<1x32x32xbf16> to vector<32x32xbf16>
    %cst_53 = arith.constant dense<0.000000e+00> : vector<16x32xf32>
    %112 = tpu.matmul %23, %111, %cst_53 {dimension_numbers = #tpu.dot_dimension_numbers<[1], [0], [0], [1], [0, 0, 1, 1], [], []>} : vector<16x32xbf16>, vector<32x32xbf16>, vector<16x32xf32> -> vector<16x32xf32>
    %113 = arith.truncf %109 : vector<16x16xf32> to vector<16x16xbf16>
    %114 = arith.truncf %112 : vector<16x32xf32> to vector<16x32xbf16>
    %cst_54 = arith.constant dense<0.000000e+00> : vector<16x32xf32>
    %115 = tpu.matmul %113, %114, %cst_54 {dimension_numbers = #tpu.dot_dimension_numbers<[1], [0], [0], [1], [0, 0, 1, 1], [], []>} : vector<16x16xbf16>, vector<16x32xbf16>, vector<16x32xf32> -> vector<16x32xf32>
    %116 = arith.addf %93, %115 : vector<16x32xf32>
    %117 = arith.addf %0, %116 : vector<16x32xf32>
    %c0_55 = arith.constant 0 : index
    %c0_56 = arith.constant 0 : index
    %118 = vector.load %arg5[%c0_55, %c0_56] : memref<1x32xf32, #tpu.memory_space<vmem>>, vector<1x32xf32>
    %cst_57 = arith.constant dense<0.000000e+00> : vector<16xf32>
    %119 = vector.multi_reduction <add>, %117, %cst_57 [1] : vector<16x32xf32> to vector<16xf32>
    %120 = vector.shape_cast %119 : vector<16xf32> to vector<16x1xf32>
    %cst_58 = arith.constant 3.200000e+01 : f32
    %121 = vector.broadcast %cst_58 : f32 to vector<16x1xf32>
    %122 = arith.divf %120, %121 : vector<16x1xf32>
    %123 = vector.broadcast %122 : vector<16x1xf32> to vector<16x32xf32>
    %124 = arith.subf %117, %123 : vector<16x32xf32>
    %125 = arith.mulf %124, %124 : vector<16x32xf32>
    %cst_59 = arith.constant dense<0.000000e+00> : vector<16xf32>
    %126 = vector.multi_reduction <add>, %125, %cst_59 [1] : vector<16x32xf32> to vector<16xf32>
    %127 = vector.shape_cast %126 : vector<16xf32> to vector<16x1xf32>
    %cst_60 = arith.constant 3.200000e+01 : f32
    %128 = vector.broadcast %cst_60 : f32 to vector<16x1xf32>
    %129 = arith.divf %127, %128 : vector<16x1xf32>
    %130 = vector.broadcast %122 : vector<16x1xf32> to vector<16x32xf32>
    %131 = arith.subf %117, %130 : vector<16x32xf32>
    %cst_61 = arith.constant 9.99999974E-6 : f32
    %132 = vector.broadcast %cst_61 : f32 to vector<16x1xf32>
    %133 = arith.addf %129, %132 : vector<16x1xf32>
    %134 = math.rsqrt %133 : vector<16x1xf32>
    %135 = vector.broadcast %134 : vector<16x1xf32> to vector<16x32xf32>
    %136 = arith.mulf %131, %135 : vector<16x32xf32>
    %137 = vector.broadcast %118 : vector<1x32xf32> to vector<16x32xf32>
    %138 = arith.mulf %136, %137 : vector<16x32xf32>
    %139 = arith.truncf %138 : vector<16x32xf32> to vector<16x32xbf16>
    %c0_62 = arith.constant 0 : index
    %c0_63 = arith.constant 0 : index
    %140 = vector.load %arg6[%c0_62, %c0_63] : memref<32x128xbf16, #tpu.memory_space<vmem>>, vector<32x128xbf16>
    %cst_64 = arith.constant dense<0.000000e+00> : vector<16x128xf32>
    %141 = tpu.matmul %139, %140, %cst_64 {dimension_numbers = #tpu.dot_dimension_numbers<[1], [0], [0], [1], [0, 0, 1, 1], [], []>} : vector<16x32xbf16>, vector<32x128xbf16>, vector<16x128xf32> -> vector<16x128xf32>
    %142 = arith.mulf %141, %141 : vector<16x128xf32>
    %143 = arith.mulf %141, %142 : vector<16x128xf32>
    %cst_65 = arith.constant 4.471500e-02 : f32
    %144 = vector.broadcast %cst_65 : f32 to vector<16x128xf32>
    %145 = arith.mulf %144, %143 : vector<16x128xf32>
    %146 = arith.addf %141, %145 : vector<16x128xf32>
    %cst_66 = arith.constant 0.797884583 : f32
    %147 = vector.broadcast %cst_66 : f32 to vector<16x128xf32>
    %148 = arith.mulf %147, %146 : vector<16x128xf32>
    %149 = math.tanh %148 : vector<16x128xf32>
    %cst_67 = arith.constant 1.000000e+00 : f32
    %150 = vector.broadcast %cst_67 : f32 to vector<16x128xf32>
    %151 = arith.addf %150, %149 : vector<16x128xf32>
    %cst_68 = arith.constant 5.000000e-01 : f32
    %152 = vector.broadcast %cst_68 : f32 to vector<16x128xf32>
    %153 = arith.mulf %152, %151 : vector<16x128xf32>
    %154 = arith.mulf %141, %153 : vector<16x128xf32>
    %155 = arith.truncf %154 : vector<16x128xf32> to vector<16x128xbf16>
    %c0_69 = arith.constant 0 : index
    %c0_70 = arith.constant 0 : index
    %156 = vector.load %arg7[%c0_69, %c0_70] : memref<128x32xbf16, #tpu.memory_space<vmem>>, vector<128x32xbf16>
    %cst_71 = arith.constant dense<0.000000e+00> : vector<16x32xf32>
    %157 = tpu.matmul %155, %156, %cst_71 {dimension_numbers = #tpu.dot_dimension_numbers<[1], [0], [0], [1], [0, 0, 1, 1], [], []>} : vector<16x128xbf16>, vector<128x32xbf16>, vector<16x32xf32> -> vector<16x32xf32>
    %158 = arith.addf %117, %157 : vector<16x32xf32>
    %c0_72 = arith.constant 0 : index
    %c0_73 = arith.constant 0 : index
    %159 = vector.load %arg8[%c0_72, %c0_73] : memref<16x32xf32, #tpu.memory_space<vmem>>, vector<16x32xf32>
    tpu.vector_store %arg8[%c0_72, %c0_73], %158 {strides = array<i32>} : memref<16x32xf32, #tpu.memory_space<vmem>>, vector<16x32xf32>,
    return
  }
}

</mosaic_0001>

<llo_original>
// kernel: tpu_custom_call.1
$region0: #{tpu_custom_call.1}
  #allocation0 [shape = 'u32[]', space=smem, size = 0x4, offset = 0x4, fixed_abs, tag = 'smem constant byte address 0x4 - core index']
  #allocation1 [shape = 'u32[144,128]{1,0:T(1,128)}', space=vmem, size = 0x12000, scoped, tag = 'internal scratch']
  %s0 = inlined_call_operand.vmem [shape: f32[16,32], index: 0, kind: input, shape index: {}]
  %s1 = inlined_call_operand.vmem [shape: f32[1,32], index: 1, kind: input, shape index: {}]
  %s2 = inlined_call_operand.vmem [shape: bf16[4,32,32], index: 2, kind: input, shape index: {}]
  %s3 = inlined_call_operand.hbm [shape: bf16[4,32,32], index: 3, kind: input, shape index: {}]
  %s4 = inlined_call_operand.hbm [shape: f32[16,16], index: 4, kind: input, shape index: {}]
  %s5 = inlined_call_operand.vmem [shape: f32[1,32], index: 5, kind: input, shape index: {}]
  %s6 = inlined_call_operand.hbm [shape: bf16[32,128], index: 6, kind: input, shape index: {}]
  %s7 = inlined_call_operand.vmem [shape: bf16[128,32], index: 7, kind: input, shape index: {}]
  %s8 = inlined_call_operand.hbm [shape: f32[16,32], index: 8, kind: output, shape index: {}]
  %s9 = sld [smem:[#allocation0]]
  $region54: #{tpu_custom_call.1} parent=0
    _
  %s11 = ssub.s32 1, %s9
  %s12 = scalar_select 0, %s11, %s9
  $region1: #{tpu_custom_call.1} parent=0
    #allocation2 [shape = 'u8[32768]{0}', space=vmem, size = 0x8000, scoped, tag = 'input window, operand 3, single buffered']
    #allocation3 [shape = 's32[1]{0}', space=sflag, size = 0x4, scoped, tag = 'scoped memory for tpu_custom_call.1']
    #allocation4 [shape = 's32[1]{0}', space=sflag, size = 0x4, scoped, tag = 'scoped memory for tpu_custom_call.1']
    #allocation5 [shape = 'u8[8192]{0}', space=vmem, size = 0x2000, scoped, tag = 'input window, operand 4, single buffered']
    #allocation6 [shape = 's32[1]{0}', space=sflag, size = 0x4, scoped, tag = 'scoped memory for tpu_custom_call.1']
    #allocation7 [shape = 'u8[8192]{0}', space=vmem, size = 0x2000, scoped, tag = 'input window, operand 6, single buffered']
    #allocation8 [shape = 'u8[8192]{0}', space=vmem, size = 0x2000, scoped, tag = 'output window, operand 0, single buffered']
    %13 = vsyncpa [#allocation3], 0
    %14 = vsyncpa [#allocation6], 0
    %15 = vsyncpa [#allocation4], 0
    // Predicated region
    $region2: #{tpu_custom_call.1} parent=1 // pred_check
      _
    $region3: #{tpu_custom_call.1} parent=1 // pred_check_branch
      %17 = sbr.rel (0) target = $region5
    $region4: #{tpu_custom_call.1} parent=1 // pred_region
      _
    $region5: #{tpu_custom_call.1} parent=1 // pred_fallthru
      _
    // Predicated region
    $region6: #{tpu_custom_call.1} parent=1 // pred_check
      _
    $region7: #{tpu_custom_call.1} parent=1 // pred_check_branch
      %19 = sbr.rel (0) target = $region9
    $region8: #{tpu_custom_call.1} parent=1 // pred_region
      _
    $region9: #{tpu_custom_call.1} parent=1 // pred_fallthru
      _
    // Predicated region
    $region10: #{tpu_custom_call.1} parent=1 // pred_check
      _
    $region11: #{tpu_custom_call.1} parent=1 // pred_check_branch
      %21 = sbr.rel (0) target = $region13
    $region12: #{tpu_custom_call.1} parent=1 // pred_region
      _
    $region13: #{tpu_custom_call.1} parent=1 // pred_fallthru
      _
    // Predicated region
    $region14: #{tpu_custom_call.1} parent=1 // pred_check
      _
    $region15: #{tpu_custom_call.1} parent=1 // pred_check_branch
      %23 = sbr.rel (0) target = $region17
    $region16: #{tpu_custom_call.1} parent=1 // pred_region
      %s25 = ssub.s32 1024, 1024
      %26 = vsyncadd [#allocation3], %s25
      %s27 = sshll.u32 [#allocation2], 4
      %s28 = int_to_ptr.vmem [resolvable:$true] %s27
      %33 = dma.hbm_to_vmem [thread:$0]  %s3, 1024, %s28, [#allocation3], 64, 64, 4
    $region17: #{tpu_custom_call.1} parent=1 // pred_fallthru
      _
    // Predicated region
    $region18: #{tpu_custom_call.1} parent=1 // pred_check
      _
    $region19: #{tpu_custom_call.1} parent=1 // pred_check_branch
      %35 = sbr.rel (0) target = $region21
    $region20: #{tpu_custom_call.1} parent=1 // pred_region
      %s37 = ssub.s32 256, 256
      %38 = vsyncadd [#allocation6], %s37
      %s39 = sshll.u32 [#allocation5], 4
      %s40 = int_to_ptr.vmem [resolvable:$true] %s39
      %45 = dma.hbm_to_vmem [thread:$0]  %s4, 256, %s40, [#allocation6], 128, 128, 8
    $region21: #{tpu_custom_call.1} parent=1 // pred_fallthru
      _
    // Predicated region
    $region22: #{tpu_custom_call.1} parent=1 // pred_check
      _
    $region23: #{tpu_custom_call.1} parent=1 // pred_check_branch
      %47 = sbr.rel (0) target = $region25
    $region24: #{tpu_custom_call.1} parent=1 // pred_region
      _
    $region25: #{tpu_custom_call.1} parent=1 // pred_fallthru
      _
    // Predicated region
    $region26: #{tpu_custom_call.1} parent=1 // pred_check
      _
    $region27: #{tpu_custom_call.1} parent=1 // pred_check_branch
      %49 = sbr.rel (0) target = $region29
    $region28: #{tpu_custom_call.1} parent=1 // pred_region
      %s51 = ssub.s32 256, 256
      %52 = vsyncadd [#allocation6], %s51
      %s53 = sshll.u32 [#allocation7], 4
      %s54 = int_to_ptr.vmem [resolvable:$true] %s53
      %59 = dma.hbm_to_vmem [thread:$0]  %s6, 256, %s54, [#allocation6], 64, 64, 4
    $region29: #{tpu_custom_call.1} parent=1 // pred_fallthru
      _
    // Predicated region
    $region30: #{tpu_custom_call.1} parent=1 // pred_check
      _
    $region31: #{tpu_custom_call.1} parent=1 // pred_check_branch
      %61 = sbr.rel (0) target = $region33
    $region32: #{tpu_custom_call.1} parent=1 // pred_region
      _
    $region33: #{tpu_custom_call.1} parent=1 // pred_fallthru
      _
    // Predicated region
    $region34: #{tpu_custom_call.1} parent=1 // pred_check
      _
    $region35: #{tpu_custom_call.1} parent=1 // pred_check_branch
      %63 = sbr.rel (0) target = $region37
    $region36: #{tpu_custom_call.1} parent=1 // pred_region
      %64 = dma.done [#allocation3], 1024
    $region37: #{tpu_custom_call.1} parent=1 // pred_fallthru
      _
    // Predicated region
    $region38: #{tpu_custom_call.1} parent=1 // pred_check
      _
    $region39: #{tpu_custom_call.1} parent=1 // pred_check_branch
      %66 = sbr.rel (0) target = $region41
    $region40: #{tpu_custom_call.1} parent=1 // pred_region
      %67 = dma.done [#allocation6], 256
    $region41: #{tpu_custom_call.1} parent=1 // pred_fallthru
      _
    // Predicated region
    $region42: #{tpu_custom_call.1} parent=1 // pred_check
      _
    $region43: #{tpu_custom_call.1} parent=1 // pred_check_branch
      %69 = sbr.rel (0) target = $region45
    $region44: #{tpu_custom_call.1} parent=1 // pred_region
      %70 = dma.done [#allocation6], 256
    $region45: #{tpu_custom_call.1} parent=1 // pred_fallthru
      _
    %v72 = vld [vmem:[%s0] sm:$0xff]
    %v73 = vld [vmem:[%s0 + $0x8] sm:$0xff]
    %v74 = vld [vmem:[#allocation5] sm:$0xff]
    %v75 = vld [vmem:[#allocation5 + $0x8] sm:$0xff]
    %v76 = vld [vmem:[%s1] sm:$0x1]
    %vm77 = vcmask 261120
    %v78 = vsel %vm77, %v72, 0.0
    %79 = vadd.xlane.f32.xlu0 %v78
    %v80 = vpop.xlane.xlu0 %79
    %v81 = vsel %vm77, %v73, 0.0
    %82 = vadd.xlane.f32.xlu0 %v81
    %v83 = vpop.xlane.xlu0 %82
    %v84 = vrcp.pop 32.0
    %v85 = vmul.f32 %v80, %v84
    %v86 = vmul.f32 %v83, %v84
    %v87 = vsub.f32 %v72, %v85
    %v88 = vsub.f32 %v73, %v86
    %v89 = vmul.f32 %v87, %v87
    %v90 = vmul.f32 %v88, %v88
    %v91 = vsel %vm77, %v89, 0.0
    %92 = vadd.xlane.f32.xlu0 %v91
    %v93 = vpop.xlane.xlu0 %92
    %v94 = vsel %vm77, %v90, 0.0
    %95 = vadd.xlane.f32.xlu0 %v94
    %v96 = vpop.xlane.xlu0 %95
    %v97 = vmul.f32 %v93, %v84
    %v98 = vmul.f32 %v96, %v84
    %v99 = vadd.f32 %v97, 1e-05
    %v100 = vadd.f32 %v98, 1e-05
    %v101 = vrsqrt.pop %v99
    %v102 = vrsqrt.pop %v100
    %v103 = vmul.f32 %v87, %v101
    %v104 = vmul.f32 %v88, %v102
    %v106 = vlaneseq
    %v107 = vshrl.u32 %v106, 7
    %v108 = vsub.s32 0, %v107
    %v109 = vrot.slane %v76, %v108
    %v111 = vmul.f32 %v103, %v109
    %v112 = vmul.f32 %v104, %v109
    %v113 = vpack.c.bf16 %v112, %v111
    %v114 = vld [vmem:[%s2] sm:$0xf]
    %v115 = vld [vmem:[%s2 + $0x4] sm:$0xf]
    %v116 = vld [vmem:[%s2 + $0x8] sm:$0xf]
    %v117 = vld [vmem:[%s2 + $0xc] sm:$0xf]
    %v122 = vunpack.c.l.b16 %v114
    %v123 = vunpack.c.l.b16 %v115
    %v124 = vunpack.c.l.b16 %v116
    %v125 = vunpack.c.l.b16 %v117
    %v126 = vpack.c.b16 %v123, %v122
    %v127 = vpack.c.b16 %v125, %v124
    %v131 = vsel %vm77, %v113, 0
    %133 = vmatprep.subr.bf16.mxu0 0
    %134 = vmatpush1.bf16.msra.mxu0 %v126
    %135 = vmatprep.subr.bf16.mxu0 0
    %136 = vmatpush1.bf16.msra.mxu0 %v127
    %137 = vmatprep.subr.bf16.mxu0 0
    %138 = vmatpush1.bf16.msra.mxu0 0
    %139 = vmatprep.subr.bf16.mxu0 0
    %140 = vmatpush1.bf16.msra.mxu0 0
    %141 = vmatprep.subr.bf16.mxu0 0
    %142 = vmatpush1.bf16.msra.mxu0 0
    %143 = vmatprep.subr.bf16.mxu0 0
    %144 = vmatpush1.bf16.msra.mxu0 0
    %145 = vmatprep.subr.bf16.mxu0 0
    %146 = vmatpush1.bf16.msra.mxu0 0
    %147 = vmatprep.subr.bf16.mxu0 0
    %148 = vmatpush1.bf16.msra.mxu0 0
    %149 = vmatprep.subr.bf16.mxu0 0
    %150 = vmatpush1.bf16.msra.mxu0 0
    %151 = vmatprep.subr.bf16.mxu0 0
    %152 = vmatpush1.bf16.msra.mxu0 0
    %153 = vmatprep.subr.bf16.mxu0 0
    %154 = vmatpush1.bf16.msra.mxu0 0
    %155 = vmatprep.subr.bf16.mxu0 0
    %156 = vmatpush1.bf16.msra.mxu0 0
    %157 = vmatprep.subr.bf16.mxu0 0
    %158 = vmatpush1.bf16.msra.mxu0 0
    %159 = vmatprep.subr.bf16.mxu0 0
    %160 = vmatpush1.bf16.msra.mxu0 0
    %161 = vmatprep.subr.bf16.mxu0 0
    %162 = vmatpush1.bf16.msra.mxu0 0
    %163 = vmatprep.subr.bf16.mxu0 0
    %164 = vmatpush1.bf16.msra.mxu0 0
    %165 = vmatprep.mubr.bf16.mxu0 0
    %166 = vmatmul.mubr.bf16.gmra.mrb[0].mxu0 %v131
    %v167 = vpop.f32.mrb[0].mxu0
    %v168 = vadd.f32 0.0, %v167
    %v169 = vpop.f32.mrb[0].mxu0
    %v170 = vpop.f32.mrb[0].mxu0
    %v171 = vadd.f32 0.0, %v170
    %v172 = vpop.f32.mrb[0].mxu0
    %173 = vdwg.mxu0
    %v174 = vpack.c.bf16 %v171, %v168
    %v176 = vsel %vm77, %v174, 0
    %178 = vmatprep.subr.bf16.mxu0 0
    %179 = vmatpush1.bf16.xpose.msra.mxu0 %v131
    %180 = vmatprep.subr.bf16.mxu0 0
    %181 = vmatpush1.bf16.xpose.msra.mxu0 0
    %182 = vmatprep.subr.bf16.mxu0 0
    %183 = vmatpush1.bf16.xpose.msra.mxu0 0
    %184 = vmatprep.subr.bf16.mxu0 0
    %185 = vmatpush1.bf16.xpose.msra.mxu0 0
    %186 = vmatprep.subr.bf16.mxu0 0
    %187 = vmatpush1.bf16.xpose.msra.mxu0 0
    %188 = vmatprep.subr.bf16.mxu0 0
    %189 = vmatpush1.bf16.xpose.msra.mxu0 0
    %190 = vmatprep.subr.bf16.mxu0 0
    %191 = vmatpush1.bf16.xpose.msra.mxu0 0
    %192 = vmatprep.subr.bf16.mxu0 0
    %193 = vmatpush1.bf16.xpose.msra.mxu0 0
    %194 = vmatprep.subr.bf16.mxu0 0
    %195 = vmatpush1.bf16.xpose.msra.mxu0 0
    %196 = vmatprep.subr.bf16.mxu0 0
    %197 = vmatpush1.bf16.xpose.msra.mxu0 0
    %198 = vmatprep.subr.bf16.mxu0 0
    %199 = vmatpush1.bf16.xpose.msra.mxu0 0
    %200 = vmatprep.subr.bf16.mxu0 0
    %201 = vmatpush1.bf16.xpose.msra.mxu0 0
    %202 = vmatprep.subr.bf16.mxu0 0
    %203 = vmatpush1.bf16.xpose.msra.mxu0 0
    %204 = vmatprep.subr.bf16.mxu0 0
    %205 = vmatpush1.bf16.xpose.msra.mxu0 0
    %206 = vmatprep.subr.bf16.mxu0 0
    %207 = vmatpush1.bf16.xpose.msra.mxu0 0
    %208 = vmatprep.subr.bf16.mxu0 0
    %209 = vmatpush1.bf16.xpose.msra.mxu0 0
    %210 = vmatprep.mubr.bf16.mxu0 0
    %211 = vmatmul.mubr.bf16.gmra.mrb[0].mxu0 %v176
    %v212 = vpop.f32.mrb[0].mxu0
    %v213 = vadd.f32 %v74, %v212
    %v214 = vpop.f32.mrb[0].mxu0
    %v215 = vpop.f32.mrb[0].mxu0
    %v216 = vadd.f32 %v75, %v215
    %v217 = vpop.f32.mrb[0].mxu0
    %218 = vdwg.mxu0
    %vm219 = vcmask 130048
    %v220 = vsel %vm219, %v213, -inf
    %221 = vmax.xlane.f32.xlu0 %v220
    %v222 = vpop.xlane.xlu0 %221
    %v223 = vsel %vm219, %v216, -inf
    %224 = vmax.xlane.f32.xlu0 %v223
    %v225 = vpop.xlane.xlu0 %224
    %v226 = vsub.f32 %v213, %v222
    %v227 = vsub.f32 %v216, %v225
    %v228 = vmul.f32 %v226, 1.442695
    %v229 = vpow.pop %v228
    %v230 = vmul.f32 %v227, 1.442695
    %v231 = vpow.pop %v230
    %v232 = vsel %vm219, %v229, 0.0
    %233 = vadd.xlane.f32.xlu0 %v232
    %v234 = vpop.xlane.xlu0 %233
    %v235 = vsel %vm219, %v231, 0.0
    %236 = vadd.xlane.f32.xlu0 %v235
    %v237 = vpop.xlane.xlu0 %236
    %v238 = vrcp.pop %v234
    %v239 = vrcp.pop %v237
    %v240 = vmul.f32 %v229, %v238
    %v241 = vmul.f32 %v231, %v239
    %v242 = vld [vmem:[#allocation2] sm:$0xf]
    %v243 = vld [vmem:[#allocation2 + $0x4] sm:$0xf]
    %v244 = vld [vmem:[#allocation2 + $0x8] sm:$0xf]
    %v245 = vld [vmem:[#allocation2 + $0xc] sm:$0xf]
    %v250 = vunpack.c.l.b16 %v242
    %v251 = vunpack.c.l.b16 %v243
    %v252 = vunpack.c.l.b16 %v244
    %v253 = vunpack.c.l.b16 %v245
    %v254 = vpack.c.b16 %v251, %v250
    %v255 = vpack.c.b16 %v253, %v252
    %258 = vmatprep.subr.bf16.mxu0 0
    %259 = vmatpush1.bf16.msra.mxu0 %v254
    %260 = vmatprep.subr.bf16.mxu0 0
    %261 = vmatpush1.bf16.msra.mxu0 %v255
    %262 = vmatprep.subr.bf16.mxu0 0
    %263 = vmatpush1.bf16.msra.mxu0 0
    %264 = vmatprep.subr.bf16.mxu0 0
    %265 = vmatpush1.bf16.msra.mxu0 0
    %266 = vmatprep.subr.bf16.mxu0 0
    %267 = vmatpush1.bf16.msra.mxu0 0
    %268 = vmatprep.subr.bf16.mxu0 0
    %269 = vmatpush1.bf16.msra.mxu0 0
    %270 = vmatprep.subr.bf16.mxu0 0
    %271 = vmatpush1.bf16.msra.mxu0 0
    %272 = vmatprep.subr.bf16.mxu0 0
    %273 = vmatpush1.bf16.msra.mxu0 0
    %274 = vmatprep.subr.bf16.mxu0 0
    %275 = vmatpush1.bf16.msra.mxu0 0
    %276 = vmatprep.subr.bf16.mxu0 0
    %277 = vmatpush1.bf16.msra.mxu0 0
    %278 = vmatprep.subr.bf16.mxu0 0
    %279 = vmatpush1.bf16.msra.mxu0 0
    %280 = vmatprep.subr.bf16.mxu0 0
    %281 = vmatpush1.bf16.msra.mxu0 0
    %282 = vmatprep.subr.bf16.mxu0 0
    %283 = vmatpush1.bf16.msra.mxu0 0
    %284 = vmatprep.subr.bf16.mxu0 0
    %285 = vmatpush1.bf16.msra.mxu0 0
    %286 = vmatprep.subr.bf16.mxu0 0
    %287 = vmatpush1.bf16.msra.mxu0 0
    %288 = vmatprep.subr.bf16.mxu0 0
    %289 = vmatpush1.bf16.msra.mxu0 0
    %290 = vmatprep.mubr.bf16.mxu0 0
    %291 = vmatmul.mubr.bf16.gmra.mrb[0].mxu0 %v131
    %v292 = vpop.f32.mrb[0].mxu0
    %v293 = vadd.f32 0.0, %v292
    %v294 = vpop.f32.mrb[0].mxu0
    %v295 = vpop.f32.mrb[0].mxu0
    %v296 = vadd.f32 0.0, %v295
    %v297 = vpop.f32.mrb[0].mxu0
    %298 = vdwg.mxu0
    %v299 = vpack.c.bf16 %v241, %v240
    %v300 = vpack.c.bf16 %v296, %v293
    %s301 = scalar_lea.vmem %s2, 16
    %v302 = vld [vmem:[%s301] sm:$0xf]
    %v303 = vld [vmem:[%s301 + $0x4] sm:$0xf]
    %v304 = vld [vmem:[%s301 + $0x8] sm:$0xf]
    %v305 = vld [vmem:[%s301 + $0xc] sm:$0xf]
    %v310 = vunpack.c.l.b16 %v302
    %v311 = vunpack.c.l.b16 %v303
    %v312 = vunpack.c.l.b16 %v304
    %v313 = vunpack.c.l.b16 %v305
    %v314 = vpack.c.b16 %v311, %v310
    %v315 = vpack.c.b16 %v313, %v312
    %318 = vmatprep.subr.bf16.mxu0 0
    %319 = vmatpush1.bf16.msra.mxu0 %v314
    %320 = vmatprep.subr.bf16.mxu0 0
    %321 = vmatpush1.bf16.msra.mxu0 %v315
    %322 = vmatprep.subr.bf16.mxu0 0
    %323 = vmatpush1.bf16.msra.mxu0 0
    %324 = vmatprep.subr.bf16.mxu0 0
    %325 = vmatpush1.bf16.msra.mxu0 0
    %326 = vmatprep.subr.bf16.mxu0 0
    %327 = vmatpush1.bf16.msra.mxu0 0
    %328 = vmatprep.subr.bf16.mxu0 0
    %329 = vmatpush1.bf16.msra.mxu0 0
    %330 = vmatprep.subr.bf16.mxu0 0
    %331 = vmatpush1.bf16.msra.mxu0 0
    %332 = vmatprep.subr.bf16.mxu0 0
    %333 = vmatpush1.bf16.msra.mxu0 0
    %334 = vmatprep.subr.bf16.mxu0 0
    %335 = vmatpush1.bf16.msra.mxu0 0
    %336 = vmatprep.subr.bf16.mxu0 0
    %337 = vmatpush1.bf16.msra.mxu0 0
    %338 = vmatprep.subr.bf16.mxu0 0
    %339 = vmatpush1.bf16.msra.mxu0 0
    %340 = vmatprep.subr.bf16.mxu0 0
    %341 = vmatpush1.bf16.msra.mxu0 0
    %342 = vmatprep.subr.bf16.mxu0 0
    %343 = vmatpush1.bf16.msra.mxu0 0
    %344 = vmatprep.subr.bf16.mxu0 0
    %345 = vmatpush1.bf16.msra.mxu0 0
    %346 = vmatprep.subr.bf16.mxu0 0
    %347 = vmatpush1.bf16.msra.mxu0 0
    %348 = vmatprep.subr.bf16.mxu0 0
    %349 = vmatpush1.bf16.msra.mxu0 0
    %350 = vmatprep.mubr.bf16.mxu0 0
    %351 = vmatmul.mubr.bf16.gmra.mrb[0].mxu0 %v131
    %v352 = vpop.f32.mrb[0].mxu0
    %v353 = vadd.f32 0.0, %v352
    %v354 = vpop.f32.mrb[0].mxu0
    %v355 = vpop.f32.mrb[0].mxu0
    %v356 = vadd.f32 0.0, %v355
    %v357 = vpop.f32.mrb[0].mxu0
    %358 = vdwg.mxu0
    %v359 = vpack.c.bf16 %v356, %v353
    %v361 = vsel %vm77, %v359, 0
    %363 = vmatprep.subr.bf16.mxu0 0
    %364 = vmatpush1.bf16.xpose.msra.mxu0 %v131
    %365 = vmatprep.subr.bf16.mxu0 0
    %366 = vmatpush1.bf16.xpose.msra.mxu0 0
    %367 = vmatprep.subr.bf16.mxu0 0
    %368 = vmatpush1.bf16.xpose.msra.mxu0 0
    %369 = vmatprep.subr.bf16.mxu0 0
    %370 = vmatpush1.bf16.xpose.msra.mxu0 0
    %371 = vmatprep.subr.bf16.mxu0 0
    %372 = vmatpush1.bf16.xpose.msra.mxu0 0
    %373 = vmatprep.subr.bf16.mxu0 0
    %374 = vmatpush1.bf16.xpose.msra.mxu0 0
    %375 = vmatprep.subr.bf16.mxu0 0
    %376 = vmatpush1.bf16.xpose.msra.mxu0 0
    %377 = vmatprep.subr.bf16.mxu0 0
    %378 = vmatpush1.bf16.xpose.msra.mxu0 0
    %379 = vmatprep.subr.bf16.mxu0 0
    %380 = vmatpush1.bf16.xpose.msra.mxu0 0
    %381 = vmatprep.subr.bf16.mxu0 0
    %382 = vmatpush1.bf16.xpose.msra.mxu0 0
    %383 = vmatprep.subr.bf16.mxu0 0
    %384 = vmatpush1.bf16.xpose.msra.mxu0 0
    %385 = vmatprep.subr.bf16.mxu0 0
    %386 = vmatpush1.bf16.xpose.msra.mxu0 0
    %387 = vmatprep.subr.bf16.mxu0 0
    %388 = vmatpush1.bf16.xpose.msra.mxu0 0
    %389 = vmatprep.subr.bf16.mxu0 0
    %390 = vmatpush1.bf16.xpose.msra.mxu0 0
    %391 = vmatprep.subr.bf16.mxu0 0
    %392 = vmatpush1.bf16.xpose.msra.mxu0 0
    %393 = vmatprep.subr.bf16.mxu0 0
    %394 = vmatpush1.bf16.xpose.msra.mxu0 0
    %395 = vmatprep.mubr.bf16.mxu0 0
    %396 = vmatmul.mubr.bf16.gmra.mrb[0].mxu0 %v361
    %v397 = vpop.f32.mrb[0].mxu0
    %v398 = vadd.f32 %v74, %v397
    %v399 = vpop.f32.mrb[0].mxu0
    %v400 = vpop.f32.mrb[0].mxu0
    %v401 = vadd.f32 %v75, %v400
    %v402 = vpop.f32.mrb[0].mxu0
    %403 = vdwg.mxu0
    %v404 = vsel %vm219, %v398, -inf
    %405 = vmax.xlane.f32.xlu0 %v404
    %v406 = vpop.xlane.xlu0 %405
    %v407 = vsel %vm219, %v401, -inf
    %408 = vmax.xlane.f32.xlu0 %v407
    %v409 = vpop.xlane.xlu0 %408
    %v410 = vsub.f32 %v398, %v406
    %v411 = vsub.f32 %v401, %v409
    %v412 = vmul.f32 %v410, 1.442695
    %v413 = vpow.pop %v412
    %v414 = vmul.f32 %v411, 1.442695
    %v415 = vpow.pop %v414
    %v416 = vsel %vm219, %v413, 0.0
    %417 = vadd.xlane.f32.xlu0 %v416
    %v418 = vpop.xlane.xlu0 %417
    %v419 = vsel %vm219, %v415, 0.0
    %420 = vadd.xlane.f32.xlu0 %v419
    %v421 = vpop.xlane.xlu0 %420
    %v422 = vrcp.pop %v418
    %v423 = vrcp.pop %v421
    %v424 = vmul.f32 %v413, %v422
    %v425 = vmul.f32 %v415, %v423
    %s426 = scalar_lea.vmem [#allocation2], 16
    %v427 = vld [vmem:[%s426] sm:$0xf]
    %v428 = vld [vmem:[%s426 + $0x4] sm:$0xf]
    %v429 = vld [vmem:[%s426 + $0x8] sm:$0xf]
    %v430 = vld [vmem:[%s426 + $0xc] sm:$0xf]
    %v435 = vunpack.c.l.b16 %v427
    %v436 = vunpack.c.l.b16 %v428
    %v437 = vunpack.c.l.b16 %v429
    %v438 = vunpack.c.l.b16 %v430
    %v439 = vpack.c.b16 %v436, %v435
    %v440 = vpack.c.b16 %v438, %v437
    %443 = vmatprep.subr.bf16.mxu0 0
    %444 = vmatpush1.bf16.msra.mxu0 %v439
    %445 = vmatprep.subr.bf16.mxu0 0
    %446 = vmatpush1.bf16.msra.mxu0 %v440
    %447 = vmatprep.subr.bf16.mxu0 0
    %448 = vmatpush1.bf16.msra.mxu0 0
    %449 = vmatprep.subr.bf16.mxu0 0
    %450 = vmatpush1.bf16.msra.mxu0 0
    %451 = vmatprep.subr.bf16.mxu0 0
    %452 = vmatpush1.bf16.msra.mxu0 0
    %453 = vmatprep.subr.bf16.mxu0 0
    %454 = vmatpush1.bf16.msra.mxu0 0
    %455 = vmatprep.subr.bf16.mxu0 0
    %456 = vmatpush1.bf16.msra.mxu0 0
    %457 = vmatprep.subr.bf16.mxu0 0
    %458 = vmatpush1.bf16.msra.mxu0 0
    %459 = vmatprep.subr.bf16.mxu0 0
    %460 = vmatpush1.bf16.msra.mxu0 0
    %461 = vmatprep.subr.bf16.mxu0 0
    %462 = vmatpush1.bf16.msra.mxu0 0
    %463 = vmatprep.subr.bf16.mxu0 0
    %464 = vmatpush1.bf16.msra.mxu0 0
    %465 = vmatprep.subr.bf16.mxu0 0
    %466 = vmatpush1.bf16.msra.mxu0 0
    %467 = vmatprep.subr.bf16.mxu0 0
    %468 = vmatpush1.bf16.msra.mxu0 0
    %469 = vmatprep.subr.bf16.mxu0 0
    %470 = vmatpush1.bf16.msra.mxu0 0
    %471 = vmatprep.subr.bf16.mxu0 0
    %472 = vmatpush1.bf16.msra.mxu0 0
    %473 = vmatprep.subr.bf16.mxu0 0
    %474 = vmatpush1.bf16.msra.mxu0 0
    %475 = vmatprep.mubr.bf16.mxu0 0
    %476 = vmatmul.mubr.bf16.gmra.mrb[0].mxu0 %v131
    %v477 = vpop.f32.mrb[0].mxu0
    %v478 = vadd.f32 0.0, %v477
    %v479 = vpop.f32.mrb[0].mxu0
    %v480 = vpop.f32.mrb[0].mxu0
    %v481 = vadd.f32 0.0, %v480
    %v482 = vpop.f32.mrb[0].mxu0
    %483 = vdwg.mxu0
    %v484 = vpack.c.bf16 %v425, %v424
    %v485 = vpack.c.bf16 %v481, %v478
    %v487 = vsel %vm219, %v484, 0
    %489 = vmatprep.subr.bf16.mxu0 0
    %490 = vmatpush1.bf16.msra.mxu0 %v485
    %491 = vmatprep.subr.bf16.mxu0 0
    %492 = vmatpush1.bf16.msra.mxu0 0
    %493 = vmatprep.subr.bf16.mxu0 0
    %494 = vmatpush1.bf16.msra.mxu0 0
    %495 = vmatprep.subr.bf16.mxu0 0
    %496 = vmatpush1.bf16.msra.mxu0 0
    %497 = vmatprep.subr.bf16.mxu0 0
    %498 = vmatpush1.bf16.msra.mxu0 0
    %499 = vmatprep.subr.bf16.mxu0 0
    %500 = vmatpush1.bf16.msra.mxu0 0
    %501 = vmatprep.subr.bf16.mxu0 0
    %502 = vmatpush1.bf16.msra.mxu0 0
    %503 = vmatprep.subr.bf16.mxu0 0
    %504 = vmatpush1.bf16.msra.mxu0 0
    %505 = vmatprep.subr.bf16.mxu0 0
    %506 = vmatpush1.bf16.msra.mxu0 0
    %507 = vmatprep.subr.bf16.mxu0 0
    %508 = vmatpush1.bf16.msra.mxu0 0
    %509 = vmatprep.subr.bf16.mxu0 0
    %510 = vmatpush1.bf16.msra.mxu0 0
    %511 = vmatprep.subr.bf16.mxu0 0
    %512 = vmatpush1.bf16.msra.mxu0 0
    %513 = vmatprep.subr.bf16.mxu0 0
    %514 = vmatpush1.bf16.msra.mxu0 0
    %515 = vmatprep.subr.bf16.mxu0 0
    %516 = vmatpush1.bf16.msra.mxu0 0
    %517 = vmatprep.subr.bf16.mxu0 0
    %518 = vmatpush1.bf16.msra.mxu0 0
    %519 = vmatprep.subr.bf16.mxu0 0
    %520 = vmatpush1.bf16.msra.mxu0 0
    %521 = vmatprep.mubr.bf16.mxu0 0
    %522 = vmatmul.mubr.bf16.gmra.mrb[0].mxu0 %v487
    %v523 = vpop.f32.mrb[0].mxu0
    %v524 = vadd.f32 0.0, %v523
    %v525 = vpop.f32.mrb[0].mxu0
    %v526 = vpop.f32.mrb[0].mxu0
    %v527 = vadd.f32 0.0, %v526
    %v528 = vpop.f32.mrb[0].mxu0
    %529 = vdwg.mxu0
    %v531 = vsel %vm219, %v299, 0
    %533 = vmatprep.subr.bf16.mxu0 0
    %534 = vmatpush1.bf16.msra.mxu0 %v300
    %535 = vmatprep.subr.bf16.mxu0 0
    %536 = vmatpush1.bf16.msra.mxu0 0
    %537 = vmatprep.subr.bf16.mxu0 0
    %538 = vmatpush1.bf16.msra.mxu0 0
    %539 = vmatprep.subr.bf16.mxu0 0
    %540 = vmatpush1.bf16.msra.mxu0 0
    %541 = vmatprep.subr.bf16.mxu0 0
    %542 = vmatpush1.bf16.msra.mxu0 0
    %543 = vmatprep.subr.bf16.mxu0 0
    %544 = vmatpush1.bf16.msra.mxu0 0
    %545 = vmatprep.subr.bf16.mxu0 0
    %546 = vmatpush1.bf16.msra.mxu0 0
    %547 = vmatprep.subr.bf16.mxu0 0
    %548 = vmatpush1.bf16.msra.mxu0 0
    %549 = vmatprep.subr.bf16.mxu0 0
    %550 = vmatpush1.bf16.msra.mxu0 0
    %551 = vmatprep.subr.bf16.mxu0 0
    %552 = vmatpush1.bf16.msra.mxu0 0
    %553 = vmatprep.subr.bf16.mxu0 0
    %554 = vmatpush1.bf16.msra.mxu0 0
    %555 = vmatprep.subr.bf16.mxu0 0
    %556 = vmatpush1.bf16.msra.mxu0 0
    %557 = vmatprep.subr.bf16.mxu0 0
    %558 = vmatpush1.bf16.msra.mxu0 0
    %559 = vmatprep.subr.bf16.mxu0 0
    %560 = vmatpush1.bf16.msra.mxu0 0
    %561 = vmatprep.subr.bf16.mxu0 0
    %562 = vmatpush1.bf16.msra.mxu0 0
    %563 = vmatprep.subr.bf16.mxu0 0
    %564 = vmatpush1.bf16.msra.mxu0 0
    %565 = vmatprep.mubr.bf16.mxu0 0
    %566 = vmatmul.mubr.bf16.gmra.mrb[0].mxu0 %v531
    %v567 = vpop.f32.mrb[0].mxu0
    %v568 = vadd.f32 %v524, %v567
    %v569 = vpop.f32.mrb[0].mxu0
    %v570 = vpop.f32.mrb[0].mxu0
    %v571 = vadd.f32 %v527, %v570
    %v572 = vpop.f32.mrb[0].mxu0
    %573 = vdwg.mxu0
    %s574 = scalar_lea.vmem %s2, 32
    %v575 = vld [vmem:[%s574] sm:$0xf]
    %v576 = vld [vmem:[%s574 + $0x4] sm:$0xf]
    %v577 = vld [vmem:[%s574 + $0x8] sm:$0xf]
    %v578 = vld [vmem:[%s574 + $0xc] sm:$0xf]
    %v583 = vunpack.c.l.b16 %v575
    %v584 = vunpack.c.l.b16 %v576
    %v585 = vunpack.c.l.b16 %v577
    %v586 = vunpack.c.l.b16 %v578
    %v587 = vpack.c.b16 %v584, %v583
    %v588 = vpack.c.b16 %v586, %v585
    %591 = vmatprep.subr.bf16.mxu0 0
    %592 = vmatpush1.bf16.msra.mxu0 %v587
    %593 = vmatprep.subr.bf16.mxu0 0
    %594 = vmatpush1.bf16.msra.mxu0 %v588
    %595 = vmatprep.subr.bf16.mxu0 0
    %596 = vmatpush1.bf16.msra.mxu0 0
    %597 = vmatprep.subr.bf16.mxu0 0
    %598 = vmatpush1.bf16.msra.mxu0 0
    %599 = vmatprep.subr.bf16.mxu0 0
    %600 = vmatpush1.bf16.msra.mxu0 0
    %601 = vmatprep.subr.bf16.mxu0 0
    %602 = vmatpush1.bf16.msra.mxu0 0
    %603 = vmatprep.subr.bf16.mxu0 0
    %604 = vmatpush1.bf16.msra.mxu0 0
    %605 = vmatprep.subr.bf16.mxu0 0
    %606 = vmatpush1.bf16.msra.mxu0 0
    %607 = vmatprep.subr.bf16.mxu0 0
    %608 = vmatpush1.bf16.msra.mxu0 0
    %609 = vmatprep.subr.bf16.mxu0 0
    %610 = vmatpush1.bf16.msra.mxu0 0
    %611 = vmatprep.subr.bf16.mxu0 0
    %612 = vmatpush1.bf16.msra.mxu0 0
    %613 = vmatprep.subr.bf16.mxu0 0
    %614 = vmatpush1.bf16.msra.mxu0 0
    %615 = vmatprep.subr.bf16.mxu0 0
    %616 = vmatpush1.bf16.msra.mxu0 0
    %617 = vmatprep.subr.bf16.mxu0 0
    %618 = vmatpush1.bf16.msra.mxu0 0
    %619 = vmatprep.subr.bf16.mxu0 0
    %620 = vmatpush1.bf16.msra.mxu0 0
    %621 = vmatprep.subr.bf16.mxu0 0
    %622 = vmatpush1.bf16.msra.mxu0 0
    %623 = vmatprep.mubr.bf16.mxu0 0
    %624 = vmatmul.mubr.bf16.gmra.mrb[0].mxu0 %v131
    %v625 = vpop.f32.mrb[0].mxu0
    %v626 = vadd.f32 0.0, %v625
    %v627 = vpop.f32.mrb[0].mxu0
    %v628 = vpop.f32.mrb[0].mxu0
    %v629 = vadd.f32 0.0, %v628
    %v630 = vpop.f32.mrb[0].mxu0
    %631 = vdwg.mxu0
    %v632 = vpack.c.bf16 %v629, %v626
    %v634 = vsel %vm77, %v632, 0
    %636 = vmatprep.subr.bf16.mxu0 0
    %637 = vmatpush1.bf16.xpose.msra.mxu0 %v131
    %638 = vmatprep.subr.bf16.mxu0 0
    %639 = vmatpush1.bf16.xpose.msra.mxu0 0
    %640 = vmatprep.subr.bf16.mxu0 0
    %641 = vmatpush1.bf16.xpose.msra.mxu0 0
    %642 = vmatprep.subr.bf16.mxu0 0
    %643 = vmatpush1.bf16.xpose.msra.mxu0 0
    %644 = vmatprep.subr.bf16.mxu0 0
    %645 = vmatpush1.bf16.xpose.msra.mxu0 0
    %646 = vmatprep.subr.bf16.mxu0 0
    %647 = vmatpush1.bf16.xpose.msra.mxu0 0
    %648 = vmatprep.subr.bf16.mxu0 0
    %649 = vmatpush1.bf16.xpose.msra.mxu0 0
    %650 = vmatprep.subr.bf16.mxu0 0
    %651 = vmatpush1.bf16.xpose.msra.mxu0 0
    %652 = vmatprep.subr.bf16.mxu0 0
    %653 = vmatpush1.bf16.xpose.msra.mxu0 0
    %654 = vmatprep.subr.bf16.mxu0 0
    %655 = vmatpush1.bf16.xpose.msra.mxu0 0
    %656 = vmatprep.subr.bf16.mxu0 0
    %657 = vmatpush1.bf16.xpose.msra.mxu0 0
    %658 = vmatprep.subr.bf16.mxu0 0
    %659 = vmatpush1.bf16.xpose.msra.mxu0 0
    %660 = vmatprep.subr.bf16.mxu0 0
    %661 = vmatpush1.bf16.xpose.msra.mxu0 0
    %662 = vmatprep.subr.bf16.mxu0 0
    %663 = vmatpush1.bf16.xpose.msra.mxu0 0
    %664 = vmatprep.subr.bf16.mxu0 0
    %665 = vmatpush1.bf16.xpose.msra.mxu0 0
    %666 = vmatprep.subr.bf16.mxu0 0
    %667 = vmatpush1.bf16.xpose.msra.mxu0 0
    %668 = vmatprep.mubr.bf16.mxu0 0
    %669 = vmatmul.mubr.bf16.gmra.mrb[0].mxu0 %v634
    %v670 = vpop.f32.mrb[0].mxu0
    %v671 = vadd.f32 %v74, %v670
    %v672 = vpop.f32.mrb[0].mxu0
    %v673 = vpop.f32.mrb[0].mxu0
    %v674 = vadd.f32 %v75, %v673
    %v675 = vpop.f32.mrb[0].mxu0
    %676 = vdwg.mxu0
    %v677 = vsel %vm219, %v671, -inf
    %678 = vmax.xlane.f32.xlu0 %v677
    %v679 = vpop.xlane.xlu0 %678
    %v680 = vsel %vm219, %v674, -inf
    %681 = vmax.xlane.f32.xlu0 %v680
    %v682 = vpop.xlane.xlu0 %681
    %v683 = vsub.f32 %v671, %v679
    %v684 = vsub.f32 %v674, %v682
    %v685 = vmul.f32 %v683, 1.442695
    %v686 = vpow.pop %v685
    %v687 = vmul.f32 %v684, 1.442695
    %v688 = vpow.pop %v687
    %v689 = vsel %vm219, %v686, 0.0
    %690 = vadd.xlane.f32.xlu0 %v689
    %v691 = vpop.xlane.xlu0 %690
    %v692 = vsel %vm219, %v688, 0.0
    %693 = vadd.xlane.f32.xlu0 %v692
    %v694 = vpop.xlane.xlu0 %693
    %v695 = vrcp.pop %v691
    %v696 = vrcp.pop %v694
    %v697 = vmul.f32 %v686, %v695
    %v698 = vmul.f32 %v688, %v696
    %s699 = scalar_lea.vmem [#allocation2], 32
    %v700 = vld [vmem:[%s699] sm:$0xf]
    %v701 = vld [vmem:[%s699 + $0x4] sm:$0xf]
    %v702 = vld [vmem:[%s699 + $0x8] sm:$0xf]
    %v703 = vld [vmem:[%s699 + $0xc] sm:$0xf]
    %v708 = vunpack.c.l.b16 %v700
    %v709 = vunpack.c.l.b16 %v701
    %v710 = vunpack.c.l.b16 %v702
    %v711 = vunpack.c.l.b16 %v703
    %v712 = vpack.c.b16 %v709, %v708
    %v713 = vpack.c.b16 %v711, %v710
    %716 = vmatprep.subr.bf16.mxu0 0
    %717 = vmatpush1.bf16.msra.mxu0 %v712
    %718 = vmatprep.subr.bf16.mxu0 0
    %719 = vmatpush1.bf16.msra.mxu0 %v713
    %720 = vmatprep.subr.bf16.mxu0 0
    %721 = vmatpush1.bf16.msra.mxu0 0
    %722 = vmatprep.subr.bf16.mxu0 0
    %723 = vmatpush1.bf16.msra.mxu0 0
    %724 = vmatprep.subr.bf16.mxu0 0
    %725 = vmatpush1.bf16.msra.mxu0 0
    %726 = vmatprep.subr.bf16.mxu0 0
    %727 = vmatpush1.bf16.msra.mxu0 0
    %728 = vmatprep.subr.bf16.mxu0 0
    %729 = vmatpush1.bf16.msra.mxu0 0
    %730 = vmatprep.subr.bf16.mxu0 0
    %731 = vmatpush1.bf16.msra.mxu0 0
    %732 = vmatprep.subr.bf16.mxu0 0
    %733 = vmatpush1.bf16.msra.mxu0 0
    %734 = vmatprep.subr.bf16.mxu0 0
    %735 = vmatpush1.bf16.msra.mxu0 0
    %736 = vmatprep.subr.bf16.mxu0 0
    %737 = vmatpush1.bf16.msra.mxu0 0
    %738 = vmatprep.subr.bf16.mxu0 0
    %739 = vmatpush1.bf16.msra.mxu0 0
    %740 = vmatprep.subr.bf16.mxu0 0
    %741 = vmatpush1.bf16.msra.mxu0 0
    %742 = vmatprep.subr.bf16.mxu0 0
    %743 = vmatpush1.bf16.msra.mxu0 0
    %744 = vmatprep.subr.bf16.mxu0 0
    %745 = vmatpush1.bf16.msra.mxu0 0
    %746 = vmatprep.subr.bf16.mxu0 0
    %747 = vmatpush1.bf16.msra.mxu0 0
    %748 = vmatprep.mubr.bf16.mxu0 0
    %749 = vmatmul.mubr.bf16.gmra.mrb[0].mxu0 %v131
    %v750 = vpop.f32.mrb[0].mxu0
    %v751 = vadd.f32 0.0, %v750
    %v752 = vpop.f32.mrb[0].mxu0
    %v753 = vpop.f32.mrb[0].mxu0
    %v754 = vadd.f32 0.0, %v753
    %v755 = vpop.f32.mrb[0].mxu0
    %756 = vdwg.mxu0
    %v757 = vpack.c.bf16 %v698, %v697
    %v758 = vpack.c.bf16 %v754, %v751
    %v760 = vsel %vm219, %v757, 0
    %762 = vmatprep.subr.bf16.mxu0 0
    %763 = vmatpush1.bf16.msra.mxu0 %v758
    %764 = vmatprep.subr.bf16.mxu0 0
    %765 = vmatpush1.bf16.msra.mxu0 0
    %766 = vmatprep.subr.bf16.mxu0 0
    %767 = vmatpush1.bf16.msra.mxu0 0
    %768 = vmatprep.subr.bf16.mxu0 0
    %769 = vmatpush1.bf16.msra.mxu0 0
    %770 = vmatprep.subr.bf16.mxu0 0
    %771 = vmatpush1.bf16.msra.mxu0 0
    %772 = vmatprep.subr.bf16.mxu0 0
    %773 = vmatpush1.bf16.msra.mxu0 0
    %774 = vmatprep.subr.bf16.mxu0 0
    %775 = vmatpush1.bf16.msra.mxu0 0
    %776 = vmatprep.subr.bf16.mxu0 0
    %777 = vmatpush1.bf16.msra.mxu0 0
    %778 = vmatprep.subr.bf16.mxu0 0
    %779 = vmatpush1.bf16.msra.mxu0 0
    %780 = vmatprep.subr.bf16.mxu0 0
    %781 = vmatpush1.bf16.msra.mxu0 0
    %782 = vmatprep.subr.bf16.mxu0 0
    %783 = vmatpush1.bf16.msra.mxu0 0
    %784 = vmatprep.subr.bf16.mxu0 0
    %785 = vmatpush1.bf16.msra.mxu0 0
    %786 = vmatprep.subr.bf16.mxu0 0
    %787 = vmatpush1.bf16.msra.mxu0 0
    %788 = vmatprep.subr.bf16.mxu0 0
    %789 = vmatpush1.bf16.msra.mxu0 0
    %790 = vmatprep.subr.bf16.mxu0 0
    %791 = vmatpush1.bf16.msra.mxu0 0
    %792 = vmatprep.subr.bf16.mxu0 0
    %793 = vmatpush1.bf16.msra.mxu0 0
    %794 = vmatprep.mubr.bf16.mxu0 0
    %795 = vmatmul.mubr.bf16.gmra.mrb[0].mxu0 %v760
    %v796 = vpop.f32.mrb[0].mxu0
    %v797 = vadd.f32 0.0, %v796
    %v798 = vpop.f32.mrb[0].mxu0
    %v799 = vpop.f32.mrb[0].mxu0
    %v800 = vadd.f32 0.0, %v799
    %v801 = vpop.f32.mrb[0].mxu0
    %802 = vdwg.mxu0
    %v803 = vadd.f32 %v568, %v797
    %v804 = vadd.f32 %v571, %v800
    %s805 = scalar_lea.vmem %s2, 48
    %v806 = vld [vmem:[%s805] sm:$0xf]
    %v807 = vld [vmem:[%s805 + $0x4] sm:$0xf]
    %v808 = vld [vmem:[%s805 + $0x8] sm:$0xf]
    %v809 = vld [vmem:[%s805 + $0xc] sm:$0xf]
    %v814 = vunpack.c.l.b16 %v806
    %v815 = vunpack.c.l.b16 %v807
    %v816 = vunpack.c.l.b16 %v808
    %v817 = vunpack.c.l.b16 %v809
    %v818 = vpack.c.b16 %v815, %v814
    %v819 = vpack.c.b16 %v817, %v816
    %822 = vmatprep.subr.bf16.mxu0 0
    %823 = vmatpush1.bf16.msra.mxu0 %v818
    %824 = vmatprep.subr.bf16.mxu0 0
    %825 = vmatpush1.bf16.msra.mxu0 %v819
    %826 = vmatprep.subr.bf16.mxu0 0
    %827 = vmatpush1.bf16.msra.mxu0 0
    %828 = vmatprep.subr.bf16.mxu0 0
    %829 = vmatpush1.bf16.msra.mxu0 0
    %830 = vmatprep.subr.bf16.mxu0 0
    %831 = vmatpush1.bf16.msra.mxu0 0
    %832 = vmatprep.subr.bf16.mxu0 0
    %833 = vmatpush1.bf16.msra.mxu0 0
    %834 = vmatprep.subr.bf16.mxu0 0
    %835 = vmatpush1.bf16.msra.mxu0 0
    %836 = vmatprep.subr.bf16.mxu0 0
    %837 = vmatpush1.bf16.msra.mxu0 0
    %838 = vmatprep.subr.bf16.mxu0 0
    %839 = vmatpush1.bf16.msra.mxu0 0
    %840 = vmatprep.subr.bf16.mxu0 0
    %841 = vmatpush1.bf16.msra.mxu0 0
    %842 = vmatprep.subr.bf16.mxu0 0
    %843 = vmatpush1.bf16.msra.mxu0 0
    %844 = vmatprep.subr.bf16.mxu0 0
    %845 = vmatpush1.bf16.msra.mxu0 0
    %846 = vmatprep.subr.bf16.mxu0 0
    %847 = vmatpush1.bf16.msra.mxu0 0
    %848 = vmatprep.subr.bf16.mxu0 0
    %849 = vmatpush1.bf16.msra.mxu0 0
    %850 = vmatprep.subr.bf16.mxu0 0
    %851 = vmatpush1.bf16.msra.mxu0 0
    %852 = vmatprep.subr.bf16.mxu0 0
    %853 = vmatpush1.bf16.msra.mxu0 0
    %854 = vmatprep.mubr.bf16.mxu0 0
    %855 = vmatmul.mubr.bf16.gmra.mrb[0].mxu0 %v131
    %v856 = vpop.f32.mrb[0].mxu0
    %v857 = vadd.f32 0.0, %v856
    %v858 = vpop.f32.mrb[0].mxu0
    %v859 = vpop.f32.mrb[0].mxu0
    %v860 = vadd.f32 0.0, %v859
    %v861 = vpop.f32.mrb[0].mxu0
    %862 = vdwg.mxu0
    %v863 = vpack.c.bf16 %v860, %v857
    %v865 = vsel %vm77, %v863, 0
    %867 = vmatprep.subr.bf16.mxu0 0
    %868 = vmatpush1.bf16.xpose.msra.mxu0 %v131
    %869 = vmatprep.subr.bf16.mxu0 0
    %870 = vmatpush1.bf16.xpose.msra.mxu0 0
    %871 = vmatprep.subr.bf16.mxu0 0
    %872 = vmatpush1.bf16.xpose.msra.mxu0 0
    %873 = vmatprep.subr.bf16.mxu0 0
    %874 = vmatpush1.bf16.xpose.msra.mxu0 0
    %875 = vmatprep.subr.bf16.mxu0 0
    %876 = vmatpush1.bf16.xpose.msra.mxu0 0
    %877 = vmatprep.subr.bf16.mxu0 0
    %878 = vmatpush1.bf16.xpose.msra.mxu0 0
    %879 = vmatprep.subr.bf16.mxu0 0
    %880 = vmatpush1.bf16.xpose.msra.mxu0 0
    %881 = vmatprep.subr.bf16.mxu0 0
    %882 = vmatpush1.bf16.xpose.msra.mxu0 0
    %883 = vmatprep.subr.bf16.mxu0 0
    %884 = vmatpush1.bf16.xpose.msra.mxu0 0
    %885 = vmatprep.subr.bf16.mxu0 0
    %886 = vmatpush1.bf16.xpose.msra.mxu0 0
    %887 = vmatprep.subr.bf16.mxu0 0
    %888 = vmatpush1.bf16.xpose.msra.mxu0 0
    %889 = vmatprep.subr.bf16.mxu0 0
    %890 = vmatpush1.bf16.xpose.msra.mxu0 0
    %891 = vmatprep.subr.bf16.mxu0 0
    %892 = vmatpush1.bf16.xpose.msra.mxu0 0
    %893 = vmatprep.subr.bf16.mxu0 0
    %894 = vmatpush1.bf16.xpose.msra.mxu0 0
    %895 = vmatprep.subr.bf16.mxu0 0
    %896 = vmatpush1.bf16.xpose.msra.mxu0 0
    %897 = vmatprep.subr.bf16.mxu0 0
    %898 = vmatpush1.bf16.xpose.msra.mxu0 0
    %899 = vmatprep.mubr.bf16.mxu0 0
    %900 = vmatmul.mubr.bf16.gmra.mrb[0].mxu0 %v865
    %v901 = vpop.f32.mrb[0].mxu0
    %v902 = vadd.f32 %v74, %v901
    %v903 = vpop.f32.mrb[0].mxu0
    %v904 = vpop.f32.mrb[0].mxu0
    %v905 = vadd.f32 %v75, %v904
    %v906 = vpop.f32.mrb[0].mxu0
    %907 = vdwg.mxu0
    %v908 = vsel %vm219, %v902, -inf
    %909 = vmax.xlane.f32.xlu0 %v908
    %v910 = vpop.xlane.xlu0 %909
    %v911 = vsel %vm219, %v905, -inf
    %912 = vmax.xlane.f32.xlu0 %v911
    %v913 = vpop.xlane.xlu0 %912
    %v914 = vsub.f32 %v902, %v910
    %v915 = vsub.f32 %v905, %v913
    %v916 = vmul.f32 %v914, 1.442695
    %v917 = vpow.pop %v916
    %v918 = vmul.f32 %v915, 1.442695
    %v919 = vpow.pop %v918
    %v920 = vsel %vm219, %v917, 0.0
    %921 = vadd.xlane.f32.xlu0 %v920
    %v922 = vpop.xlane.xlu0 %921
    %v923 = vsel %vm219, %v919, 0.0
    %924 = vadd.xlane.f32.xlu0 %v923
    %v925 = vpop.xlane.xlu0 %924
    %v926 = vrcp.pop %v922
    %v927 = vrcp.pop %v925
    %v928 = vmul.f32 %v917, %v926
    %v929 = vmul.f32 %v919, %v927
    %s930 = scalar_lea.vmem [#allocation2], 48
    %v931 = vld [vmem:[%s930] sm:$0xf]
    %v932 = vld [vmem:[%s930 + $0x4] sm:$0xf]
    %v933 = vld [vmem:[%s930 + $0x8] sm:$0xf]
    %v934 = vld [vmem:[%s930 + $0xc] sm:$0xf]
    %v939 = vunpack.c.l.b16 %v931
    %v940 = vunpack.c.l.b16 %v932
    %v941 = vunpack.c.l.b16 %v933
    %v942 = vunpack.c.l.b16 %v934
    %v943 = vpack.c.b16 %v940, %v939
    %v944 = vpack.c.b16 %v942, %v941
    %947 = vmatprep.subr.bf16.mxu0 0
    %948 = vmatpush1.bf16.msra.mxu0 %v943
    %949 = vmatprep.subr.bf16.mxu0 0
    %950 = vmatpush1.bf16.msra.mxu0 %v944
    %951 = vmatprep.subr.bf16.mxu0 0
    %952 = vmatpush1.bf16.msra.mxu0 0
    %953 = vmatprep.subr.bf16.mxu0 0
    %954 = vmatpush1.bf16.msra.mxu0 0
    %955 = vmatprep.subr.bf16.mxu0 0
    %956 = vmatpush1.bf16.msra.mxu0 0
    %957 = vmatprep.subr.bf16.mxu0 0
    %958 = vmatpush1.bf16.msra.mxu0 0
    %959 = vmatprep.subr.bf16.mxu0 0
    %960 = vmatpush1.bf16.msra.mxu0 0
    %961 = vmatprep.subr.bf16.mxu0 0
    %962 = vmatpush1.bf16.msra.mxu0 0
    %963 = vmatprep.subr.bf16.mxu0 0
    %964 = vmatpush1.bf16.msra.mxu0 0
    %965 = vmatprep.subr.bf16.mxu0 0
    %966 = vmatpush1.bf16.msra.mxu0 0
    %967 = vmatprep.subr.bf16.mxu0 0
    %968 = vmatpush1.bf16.msra.mxu0 0
    %969 = vmatprep.subr.bf16.mxu0 0
    %970 = vmatpush1.bf16.msra.mxu0 0
    %971 = vmatprep.subr.bf16.mxu0 0
    %972 = vmatpush1.bf16.msra.mxu0 0
    %973 = vmatprep.subr.bf16.mxu0 0
    %974 = vmatpush1.bf16.msra.mxu0 0
    %975 = vmatprep.subr.bf16.mxu0 0
    %976 = vmatpush1.bf16.msra.mxu0 0
    %977 = vmatprep.subr.bf16.mxu0 0
    %978 = vmatpush1.bf16.msra.mxu0 0
    %979 = vmatprep.mubr.bf16.mxu0 0
    %980 = vmatmul.mubr.bf16.gmra.mrb[0].mxu0 %v131
    %v981 = vpop.f32.mrb[0].mxu0
    %v982 = vadd.f32 0.0, %v981
    %v983 = vpop.f32.mrb[0].mxu0
    %v984 = vpop.f32.mrb[0].mxu0
    %v985 = vadd.f32 0.0, %v984
    %v986 = vpop.f32.mrb[0].mxu0
    %987 = vdwg.mxu0
    %v988 = vpack.c.bf16 %v929, %v928
    %v989 = vpack.c.bf16 %v985, %v982
    %v991 = vsel %vm219, %v988, 0
    %993 = vmatprep.subr.bf16.mxu0 0
    %994 = vmatpush1.bf16.msra.mxu0 %v989
    %995 = vmatprep.subr.bf16.mxu0 0
    %996 = vmatpush1.bf16.msra.mxu0 0
    %997 = vmatprep.subr.bf16.mxu0 0
    %998 = vmatpush1.bf16.msra.mxu0 0
    %999 = vmatprep.subr.bf16.mxu0 0
    %1000 = vmatpush1.bf16.msra.mxu0 0
    %1001 = vmatprep.subr.bf16.mxu0 0
    %1002 = vmatpush1.bf16.msra.mxu0 0
    %1003 = vmatprep.subr.bf16.mxu0 0
    %1004 = vmatpush1.bf16.msra.mxu0 0
    %1005 = vmatprep.subr.bf16.mxu0 0
    %1006 = vmatpush1.bf16.msra.mxu0 0
    %1007 = vmatprep.subr.bf16.mxu0 0
    %1008 = vmatpush1.bf16.msra.mxu0 0
    %1009 = vmatprep.subr.bf16.mxu0 0
    %1010 = vmatpush1.bf16.msra.mxu0 0
    %1011 = vmatprep.subr.bf16.mxu0 0
    %1012 = vmatpush1.bf16.msra.mxu0 0
    %1013 = vmatprep.subr.bf16.mxu0 0
    %1014 = vmatpush1.bf16.msra.mxu0 0
    %1015 = vmatprep.subr.bf16.mxu0 0
    %1016 = vmatpush1.bf16.msra.mxu0 0
    %1017 = vmatprep.subr.bf16.mxu0 0
    %1018 = vmatpush1.bf16.msra.mxu0 0
    %1019 = vmatprep.subr.bf16.mxu0 0
    %1020 = vmatpush1.bf16.msra.mxu0 0
    %1021 = vmatprep.subr.bf16.mxu0 0
    %1022 = vmatpush1.bf16.msra.mxu0 0
    %1023 = vmatprep.subr.bf16.mxu0 0
    %1024 = vmatpush1.bf16.msra.mxu0 0
    %1025 = vmatprep.mubr.bf16.mxu0 0
    %1026 = vmatmul.mubr.bf16.gmra.mrb[0].mxu0 %v991
    %v1027 = vpop.f32.mrb[0].mxu0
    %v1028 = vadd.f32 0.0, %v1027
    %v1029 = vpop.f32.mrb[0].mxu0
    %v1030 = vpop.f32.mrb[0].mxu0
    %v1031 = vadd.f32 0.0, %v1030
    %v1032 = vpop.f32.mrb[0].mxu0
    %1033 = vdwg.mxu0
    %v1034 = vadd.f32 %v803, %v1028
    %v1035 = vadd.f32 %v804, %v1031
    %v1036 = vadd.f32 %v72, %v1034
    %v1037 = vadd.f32 %v73, %v1035
    %v1038 = vld [vmem:[%s5] sm:$0x1]
    %v1039 = vsel %vm77, %v1036, 0.0
    %1040 = vadd.xlane.f32.xlu0 %v1039
    %v1041 = vpop.xlane.xlu0 %1040
    %v1042 = vsel %vm77, %v1037, 0.0
    %1043 = vadd.xlane.f32.xlu0 %v1042
    %v1044 = vpop.xlane.xlu0 %1043
    %v1045 = vmul.f32 %v1041, %v84
    %v1046 = vmul.f32 %v1044, %v84
    %v1047 = vsub.f32 %v1036, %v1045
    %v1048 = vsub.f32 %v1037, %v1046
    %v1049 = vmul.f32 %v1047, %v1047
    %v1050 = vmul.f32 %v1048, %v1048
    %v1051 = vsel %vm77, %v1049, 0.0
    %1052 = vadd.xlane.f32.xlu0 %v1051
    %v1053 = vpop.xlane.xlu0 %1052
    %v1054 = vsel %vm77, %v1050, 0.0
    %1055 = vadd.xlane.f32.xlu0 %v1054
    %v1056 = vpop.xlane.xlu0 %1055
    %v1057 = vmul.f32 %v1053, %v84
    %v1058 = vmul.f32 %v1056, %v84
    %v1059 = vadd.f32 %v1057, 1e-05
    %v1060 = vadd.f32 %v1058, 1e-05
    %v1061 = vrsqrt.pop %v1059
    %v1062 = vrsqrt.pop %v1060
    %v1063 = vmul.f32 %v1047, %v1061
    %v1064 = vmul.f32 %v1048, %v1062
    %v1066 = vlaneseq
    %v1067 = vshrl.u32 %v1066, 7
    %v1068 = vsub.s32 0, %v1067
    %v1069 = vrot.slane %v1038, %v1068
    %v1071 = vmul.f32 %v1063, %v1069
    %v1072 = vmul.f32 %v1064, %v1069
    %v1073 = vpack.c.bf16 %v1072, %v1071
    %v1074 = vld [vmem:[#allocation7] sm:$0xf]
    %v1075 = vld [vmem:[#allocation7 + $0x4] sm:$0xf]
    %v1076 = vld [vmem:[#allocation7 + $0x8] sm:$0xf]
    %v1077 = vld [vmem:[#allocation7 + $0xc] sm:$0xf]
    %v1082 = vunpack.c.l.b16 %v1074
    %v1083 = vunpack.c.l.b16 %v1075
    %v1084 = vunpack.c.l.b16 %v1076
    %v1085 = vunpack.c.l.b16 %v1077
    %v1086 = vpack.c.b16 %v1083, %v1082
    %v1087 = vpack.c.b16 %v1085, %v1084
    %v1091 = vsel %vm77, %v1073, 0
    %1093 = vmatprep.subr.bf16.mxu0 0
    %1094 = vmatpush1.bf16.msra.mxu0 %v1086
    %1095 = vmatprep.subr.bf16.mxu0 0
    %1096 = vmatpush1.bf16.msra.mxu0 %v1087
    %1097 = vmatprep.subr.bf16.mxu0 0
    %1098 = vmatpush1.bf16.msra.mxu0 0
    %1099 = vmatprep.subr.bf16.mxu0 0
    %1100 = vmatpush1.bf16.msra.mxu0 0
    %1101 = vmatprep.subr.bf16.mxu0 0
    %1102 = vmatpush1.bf16.msra.mxu0 0
    %1103 = vmatprep.subr.bf16.mxu0 0
    %1104 = vmatpush1.bf16.msra.mxu0 0
    %1105 = vmatprep.subr.bf16.mxu0 0
    %1106 = vmatpush1.bf16.msra.mxu0 0
    %1107 = vmatprep.subr.bf16.mxu0 0
    %1108 = vmatpush1.bf16.msra.mxu0 0
    %1109 = vmatprep.subr.bf16.mxu0 0
    %1110 = vmatpush1.bf16.msra.mxu0 0
    %1111 = vmatprep.subr.bf16.mxu0 0
    %1112 = vmatpush1.bf16.msra.mxu0 0
    %1113 = vmatprep.subr.bf16.mxu0 0
    %1114 = vmatpush1.bf16.msra.mxu0 0
    %1115 = vmatprep.subr.bf16.mxu0 0
    %1116 = vmatpush1.bf16.msra.mxu0 0
    %1117 = vmatprep.subr.bf16.mxu0 0
    %1118 = vmatpush1.bf16.msra.mxu0 0
    %1119 = vmatprep.subr.bf16.mxu0 0
    %1120 = vmatpush1.bf16.msra.mxu0 0
    %1121 = vmatprep.subr.bf16.mxu0 0
    %1122 = vmatpush1.bf16.msra.mxu0 0
    %1123 = vmatprep.subr.bf16.mxu0 0
    %1124 = vmatpush1.bf16.msra.mxu0 0
    %1125 = vmatprep.mubr.bf16.mxu0 0
    %1126 = vmatmul.mubr.bf16.gmra.mrb[0].mxu0 %v1091
    %v1127 = vpop.f32.mrb[0].mxu0
    %v1128 = vadd.f32 0.0, %v1127
    %v1129 = vpop.f32.mrb[0].mxu0
    %v1130 = vpop.f32.mrb[0].mxu0
    %v1131 = vadd.f32 0.0, %v1130
    %v1132 = vpop.f32.mrb[0].mxu0
    %1133 = vdwg.mxu0
    %v1134 = vmul.f32 %v1128, %v1128
    %v1135 = vmul.f32 %v1131, %v1131
    %v1136 = vmul.f32 %v1128, %v1134
    %v1137 = vmul.f32 %v1131, %v1135
    %v1138 = vmul.f32 %v1136, 0.044715
    %v1139 = vmul.f32 %v1137, 0.044715
    %v1140 = vadd.f32 %v1128, %v1138
    %v1141 = vadd.f32 %v1131, %v1139
    %v1142 = vmul.f32 %v1140, 0.7978846
    %v1143 = vmul.f32 %v1141, 0.7978846
    %v1144 = vtanh.pop %v1142
    %v1145 = vtanh.pop %v1143
    %v1146 = vadd.f32 %v1144, 1.0
    %v1147 = vadd.f32 %v1145, 1.0
    %v1148 = vmul.f32 %v1146, 0.5
    %v1149 = vmul.f32 %v1147, 0.5
    %v1150 = vmul.f32 %v1128, %v1148
    %v1151 = vmul.f32 %v1131, %v1149
    %v1152 = vpack.c.bf16 %v1151, %v1150
    %v1153 = vld [vmem:[%s7] sm:$0xf]
    %v1154 = vld [vmem:[%s7 + $0x4] sm:$0xf]
    %v1155 = vld [vmem:[%s7 + $0x8] sm:$0xf]
    %v1156 = vld [vmem:[%s7 + $0xc] sm:$0xf]
    %v1157 = vld [vmem:[%s7 + $0x10] sm:$0xf]
    %v1158 = vld [vmem:[%s7 + $0x14] sm:$0xf]
    %v1159 = vld [vmem:[%s7 + $0x18] sm:$0xf]
    %v1160 = vld [vmem:[%s7 + $0x1c] sm:$0xf]
    %v1161 = vld [vmem:[%s7 + $0x20] sm:$0xf]
    %v1162 = vld [vmem:[%s7 + $0x24] sm:$0xf]
    %v1163 = vld [vmem:[%s7 + $0x28] sm:$0xf]
    %v1164 = vld [vmem:[%s7 + $0x2c] sm:$0xf]
    %v1165 = vld [vmem:[%s7 + $0x30] sm:$0xf]
    %v1166 = vld [vmem:[%s7 + $0x34] sm:$0xf]
    %v1167 = vld [vmem:[%s7 + $0x38] sm:$0xf]
    %v1168 = vld [vmem:[%s7 + $0x3c] sm:$0xf]
    %v1185 = vunpack.c.l.b16 %v1153
    %v1186 = vunpack.c.l.b16 %v1154
    %v1187 = vunpack.c.l.b16 %v1155
    %v1188 = vunpack.c.l.b16 %v1156
    %v1189 = vunpack.c.l.b16 %v1157
    %v1190 = vunpack.c.l.b16 %v1158
    %v1191 = vunpack.c.l.b16 %v1159
    %v1192 = vunpack.c.l.b16 %v1160
    %v1193 = vunpack.c.l.b16 %v1161
    %v1194 = vunpack.c.l.b16 %v1162
    %v1195 = vunpack.c.l.b16 %v1163
    %v1196 = vunpack.c.l.b16 %v1164
    %v1197 = vunpack.c.l.b16 %v1165
    %v1198 = vunpack.c.l.b16 %v1166
    %v1199 = vunpack.c.l.b16 %v1167
    %v1200 = vunpack.c.l.b16 %v1168
    %v1201 = vpack.c.b16 %v1186, %v1185
    %v1202 = vpack.c.b16 %v1188, %v1187
    %v1203 = vpack.c.b16 %v1190, %v1189
    %v1204 = vpack.c.b16 %v1192, %v1191
    %v1205 = vpack.c.b16 %v1194, %v1193
    %v1206 = vpack.c.b16 %v1196, %v1195
    %v1207 = vpack.c.b16 %v1198, %v1197
    %v1208 = vpack.c.b16 %v1200, %v1199
    %1217 = vmatprep.subr.bf16.mxu0 0
    %1218 = vmatpush1.bf16.msra.mxu0 %v1201
    %1219 = vmatprep.subr.bf16.mxu0 0
    %1220 = vmatpush1.bf16.msra.mxu0 %v1202
    %1221 = vmatprep.subr.bf16.mxu0 0
    %1222 = vmatpush1.bf16.msra.mxu0 %v1203
    %1223 = vmatprep.subr.bf16.mxu0 0
    %1224 = vmatpush1.bf16.msra.mxu0 %v1204
    %1225 = vmatprep.subr.bf16.mxu0 0
    %1226 = vmatpush1.bf16.msra.mxu0 %v1205
    %1227 = vmatprep.subr.bf16.mxu0 0
    %1228 = vmatpush1.bf16.msra.mxu0 %v1206
    %1229 = vmatprep.subr.bf16.mxu0 0
    %1230 = vmatpush1.bf16.msra.mxu0 %v1207
    %1231 = vmatprep.subr.bf16.mxu0 0
    %1232 = vmatpush1.bf16.msra.mxu0 %v1208
    %1233 = vmatprep.subr.bf16.mxu0 0
    %1234 = vmatpush1.bf16.msra.mxu0 0
    %1235 = vmatprep.subr.bf16.mxu0 0
    %1236 = vmatpush1.bf16.msra.mxu0 0
    %1237 = vmatprep.subr.bf16.mxu0 0
    %1238 = vmatpush1.bf16.msra.mxu0 0
    %1239 = vmatprep.subr.bf16.mxu0 0
    %1240 = vmatpush1.bf16.msra.mxu0 0
    %1241 = vmatprep.subr.bf16.mxu0 0
    %1242 = vmatpush1.bf16.msra.mxu0 0
    %1243 = vmatprep.subr.bf16.mxu0 0
    %1244 = vmatpush1.bf16.msra.mxu0 0
    %1245 = vmatprep.subr.bf16.mxu0 0
    %1246 = vmatpush1.bf16.msra.mxu0 0
    %1247 = vmatprep.subr.bf16.mxu0 0
    %1248 = vmatpush1.bf16.msra.mxu0 0
    %1249 = vmatprep.mubr.bf16.mxu0 0
    %1250 = vmatmul.mubr.bf16.gmra.mrb[0].mxu0 %v1152
    %v1251 = vpop.f32.mrb[0].mxu0
    %v1252 = vadd.f32 0.0, %v1251
    %v1253 = vpop.f32.mrb[0].mxu0
    %v1254 = vpop.f32.mrb[0].mxu0
    %v1255 = vadd.f32 0.0, %v1254
    %v1256 = vpop.f32.mrb[0].mxu0
    %1257 = vdwg.mxu0
    %v1258 = vadd.f32 %v1036, %v1252
    %v1259 = vadd.f32 %v1037, %v1255
    %1260 = vst.msk [vmem:[#allocation8] sm:$0xff] %vm77, %v1258
    %1261 = vst.msk [vmem:[#allocation8 + $0x8] sm:$0xff] %vm77, %v1259
    // Predicated region
    $region46: #{tpu_custom_call.1} parent=1 // pred_check
      _
    $region47: #{tpu_custom_call.1} parent=1 // pred_check_branch
      %1263 = sbr.rel (0) target = $region49
    $region48: #{tpu_custom_call.1} parent=1 // pred_region
      %s1265 = ssub.s32 256, 256
      %1266 = vsyncadd [#allocation4], %s1265
      %s1267 = sshll.u32 [#allocation8], 4
      %s1268 = int_to_ptr.vmem [resolvable:$true] %s1267
      %1273 = dma.vmem_to_hbm [thread:$0]  %s1268, 256, %s8, [#allocation4], 128, 128, 8
    $region49: #{tpu_custom_call.1} parent=1 // pred_fallthru
      _
    // Predicated region
    $region50: #{tpu_custom_call.1} parent=1 // pred_check
      _
    $region51: #{tpu_custom_call.1} parent=1 // pred_check_branch
      %1275 = sbr.rel (0) target = $region53
    $region52: #{tpu_custom_call.1} parent=1 // pred_region
      %1276 = dma.done [#allocation4], 256
    $region53: #{tpu_custom_call.1} parent=1 // pred_fallthru
      _
    %1277 = vsyncpa [#allocation3], 1
    %1278 = vsyncpa [#allocation6], 1
    %1279 = vsyncpa [#allocation4], 1

</llo_original>
